<compile_context>
chip_gen: v5e
topology: v5e:2x2
jax: 0.10.0
libtpu: 0.0.40
codegen_flags: <defaults>
</compile_context>

<pallas_src>
import jax
import jax.numpy as jnp
from jax import lax
from jax.experimental import pallas as pl
from jax.experimental.pallas import tpu as pltpu

REG_MAX = 16
C = REG_MAX + 1  # number of bins / classes


def _round_up(x, m):
    return ((x + m - 1) // m) * m


def _make_dfl_kernel(n_cls, tn, has_weights, elementwise):
    """Builds the kernel body for a given static configuration.

    Ref layout per grid step j (columns = flattened rows of the original problem):
      nvalid_ref : (1,)        i32 SMEM   true (unpadded) element count M
      pred_ref   : (n_cls, tn) logits     class axis on sublanes, lane-dense cols
      tgt_ref    : (1, tn)     i32        target bin indices
      w_ref      : (1, tn)     f32        per-element weights (only if has_weights)
      out_ref    : (1, 8, 128) f32        per-block partial sum (reduced modes)
                   (1, tn)     f32        per-element loss       (elementwise mode)
    """

    def kernel(nvalid_ref, pred_ref, tgt_ref, *rest):
        if has_weights:
            w_ref, out_ref = rest
        else:
            (out_ref,) = rest

        logits = pred_ref[...].astype(jnp.float32)            # (C, tn)
        tgt = jnp.clip(tgt_ref[...], 0, n_cls - 1)             # (1, tn) clamp(0, reg_max)

        # numerically stable logsumexp over the class (sublane) axis
        m = jnp.max(logits, axis=0, keepdims=True)             # (1, tn)
        lse = m + jnp.log(jnp.sum(jnp.exp(logits - m), axis=0, keepdims=True))

        # gather logit at the target index via one-hot select (VPU + sublane reduce)
        cls = lax.broadcasted_iota(jnp.int32, logits.shape, 0)  # (C, tn)
        picked = jnp.sum(jnp.where(cls == tgt, logits, 0.0), axis=0, keepdims=True)

        loss = lse - picked                                     # (1, tn) per-element CE
        if has_weights:
            loss = loss * w_ref[...].astype(jnp.float32)

        if elementwise:
            # 'none' reduction: write per-element loss; padding is sliced off in
            # the wrapper, so no masking needed here.
            out_ref[...] = loss
        else:
            # mask padding columns (beyond the true M) so they contribute 0
            j = pl.program_id(0)
            col = j * tn + lax.broadcasted_iota(jnp.int32, loss.shape, 1)
            loss = jnp.where(col < nvalid_ref[0], loss, 0.0)
            partial = jnp.sum(loss)                             # scalar per block
            out_ref[...] = jnp.broadcast_to(partial, out_ref.shape).astype(jnp.float32)

    return kernel


def dfl_loss(pred_dfl, target_dfl, weights=None, reduction="mean",
             reg_max=REG_MAX, tn=8192):
    """JAX/Pallas equivalent of DistributedFocalLoss.forward.

    pred_dfl  : [..., reg_max+1] float logits (f32 or bf16; streamed natively)
    target_dfl: [...]            integer-valued targets, same leading shape
    weights   : optional [...]   float weights
    reduction : 'mean' | 'sum' | 'none'
    """
    n_cls = reg_max + 1
    pred2d = pred_dfl.reshape(-1, n_cls)        # keep native dtype (no f32 upcast)
    M = pred2d.shape[0]

    # pick a big, lane-friendly column tile; cap it for tiny problems
    tn = int(tn)
    tn = max(512, min(tn, _round_up(M, 512)))
    tn = _round_up(tn, 512)
    G = (M + tn - 1) // tn
    M_pad = G * tn
    pad = M_pad - M

    # one-time layout plumbing: class axis -> sublanes, flattened rows -> lanes
    predT = pred2d.T                                            # (C, M)
    if pad:
        predT = jnp.pad(predT, ((0, 0), (0, pad)))
    tgt = target_dfl.reshape(1, -1).astype(jnp.int32)           # (1, M)
    if pad:
        tgt = jnp.pad(tgt, ((0, 0), (0, pad)))

    has_w = weights is not None
    args = [jnp.array([M], jnp.int32), predT, tgt]
    in_specs = [
        pl.BlockSpec((n_cls, tn), lambda j, n: (0, j)),
        pl.BlockSpec((1, tn), lambda j, n: (0, j)),
    ]
    if has_w:
        w = weights.reshape(1, -1).astype(jnp.float32)
        if pad:
            w = jnp.pad(w, ((0, 0), (0, pad)))
        args.append(w)
        in_specs.append(pl.BlockSpec((1, tn), lambda j, n: (0, j)))

    elementwise = (reduction == "none")
    kernel = _make_dfl_kernel(n_cls, tn, has_w, elementwise)

    if elementwise:
        out_shape = jax.ShapeDtypeStruct((1, M_pad), jnp.float32)
        out_spec = pl.BlockSpec((1, tn), lambda j, n: (0, j))
    else:
        # one lane-dense partial-sum block per grid step; reduced in the wrapper
        out_shape = jax.ShapeDtypeStruct((G, 8, 128), jnp.float32)
        out_spec = pl.BlockSpec((1, 8, 128), lambda j, n: (j, 0, 0))

    out = pl.pallas_call(
        kernel,
        out_shape=out_shape,
        grid_spec=pltpu.PrefetchScalarGridSpec(
            num_scalar_prefetch=1,
            grid=(G,),
            in_specs=in_specs,
            out_specs=out_spec,
        ),
        compiler_params=pltpu.CompilerParams(
            dimension_semantics=("parallel",)),
    )(*args)

    if elementwise:
        return out[0, :M].reshape(target_dfl.shape)

    total = jnp.sum(out[:, 0, 0])
    if reduction == "mean":
        return total / jnp.float32(M)   # torch loss.mean() divides by numel (= M)
    elif reduction == "sum":
        return total
    else:
        raise ValueError(f"unknown reduction: {reduction!r}")


def _reference(pred_dfl, target_dfl, weights=None, reduction="mean", reg_max=REG_MAX):
    """Pure-JAX reference matching the PyTorch forward."""
    n_cls = reg_max + 1
    logits = pred_dfl.reshape(-1, n_cls).astype(jnp.float32)
    tgt = jnp.clip(target_dfl.reshape(-1).astype(jnp.int32), 0, reg_max)
    lse = jax.nn.logsumexp(logits, axis=-1)
    picked = jnp.take_along_axis(logits, tgt[:, None], axis=-1)[:, 0]
    loss = (lse - picked).reshape(target_dfl.shape)
    if weights is not None:
        loss = loss * weights.astype(jnp.float32)
    if reduction == "mean":
        return jnp.mean(loss)
    if reduction == "sum":
        return jnp.sum(loss)
    return loss


if __name__ == "__main__":
    key = jax.random.PRNGKey(0)
    k1, k2, k3 = jax.random.split(key, 3)

    B, N = 2, 1500  # M = 3000 flattened rows (deliberately not a tile multiple)
    pred_dfl = jax.random.normal(k1, (B, N, C), jnp.float32)
    target_dfl = jax.random.randint(k2, (B, N), -2, REG_MAX + 3)  # exercises clamp
    weights = jax.random.uniform(k3, (B, N), jnp.float32)

    # mean, weighted, default large tile (single padded block + in-kernel mask)
    o1 = jax.block_until_ready(dfl_loss(pred_dfl, target_dfl, weights, reduction="mean"))
    r1 = _reference(pred_dfl, target_dfl, weights, "mean")
    assert jnp.allclose(o1, r1, rtol=1e-5, atol=1e-5), (o1, r1)

    # mean, unweighted (no dummy weights stream), small tile -> multi-block grid
    o2 = jax.block_until_ready(dfl_loss(pred_dfl, target_dfl, None, reduction="mean", tn=512))
    r2 = _reference(pred_dfl, target_dfl, None, "mean")
    assert jnp.allclose(o2, r2, rtol=1e-5, atol=1e-5), (o2, r2)

    # sum, weighted, multi-block
    o3 = jax.block_until_ready(dfl_loss(pred_dfl, target_dfl, weights, reduction="sum", tn=512))
    r3 = _reference(pred_dfl, target_dfl, weights, "sum")
    assert jnp.allclose(o3, r3, rtol=1e-5, atol=1e-4), (o3, r3)

    # 'none' reduction: per-element weighted loss, reshaped to target shape
    o4 = jax.block_until_ready(dfl_loss(pred_dfl, target_dfl, weights, reduction="none", tn=1024))
    r4 = _reference(pred_dfl, target_dfl, weights, "none")
    assert o4.shape == target_dfl.shape
    assert jnp.allclose(o4, r4, rtol=1e-5, atol=1e-5), "none-reduction mismatch"

    print("KERNEL_OK")
</pallas_src>

<mosaic_0001>
module attributes {stable_mosaic.version = 11 : i64} {
  func.func @kernel(%arg0: i32, %arg1: memref<1xi32, #tpu.memory_space<smem>>, %arg2: memref<17x3072xf32, #tpu.memory_space<vmem>>, %arg3: memref<1x3072xi32, #tpu.memory_space<vmem>>, %arg4: memref<1x3072xf32, #tpu.memory_space<vmem>>, %arg5: memref<1x8x128xf32, #tpu.memory_space<vmem>>) attributes {dimension_semantics = [#tpu.dimension_semantics<parallel>], iteration_bounds = array<i64: 1>, scalar_prefetch = 1 : i64, scratch_operands = 0 : i64, tpu.core_type = #tpu.core_type<tc>, window_params = [{transform_indices = @transform_0, window_bounds = array<i64: 17, 3072>}, {transform_indices = @transform_1, window_bounds = array<i64: 1, 3072>}, {transform_indices = @transform_2, window_bounds = array<i64: 1, 3072>}, {transform_indices = @transform_3, window_bounds = array<i64: 1, 8, 128>}]} {
    %c0 = arith.constant 0 : index
    %c0_0 = arith.constant 0 : index
    %0 = vector.load %arg2[%c0, %c0_0] : memref<17x3072xf32, #tpu.memory_space<vmem>>, vector<17x3072xf32>
    %c0_1 = arith.constant 0 : index
    %c0_2 = arith.constant 0 : index
    %1 = vector.load %arg3[%c0_1, %c0_2] : memref<1x3072xi32, #tpu.memory_space<vmem>>, vector<1x3072xi32>
    %c0_i32 = arith.constant 0 : i32
    %c16_i32 = arith.constant 16 : i32
    %2 = vector.broadcast %c0_i32 : i32 to vector<1x3072xi32>
    %3 = arith.maxsi %2, %1 : vector<1x3072xi32>
    %4 = vector.broadcast %c16_i32 : i32 to vector<1x3072xi32>
    %5 = arith.minsi %4, %3 : vector<1x3072xi32>
    %cst = arith.constant dense<0xFF800000> : vector<3072xf32>
    %6 = vector.multi_reduction <maximumf>, %0, %cst [0] : vector<17x3072xf32> to vector<3072xf32>
    %7 = vector.shape_cast %6 : vector<3072xf32> to vector<1x3072xf32>
    %8 = vector.broadcast %7 : vector<1x3072xf32> to vector<17x3072xf32>
    %9 = arith.subf %0, %8 : vector<17x3072xf32>
    %10 = math.exp %9 : vector<17x3072xf32>
    %cst_3 = arith.constant dense<0.000000e+00> : vector<3072xf32>
    %11 = vector.multi_reduction <add>, %10, %cst_3 [0] : vector<17x3072xf32> to vector<3072xf32>
    %12 = vector.shape_cast %11 : vector<3072xf32> to vector<1x3072xf32>
    %13 = math.log %12 : vector<1x3072xf32>
    %14 = arith.addf %7, %13 : vector<1x3072xf32>
    %15 = tpu.iota {dimensions = array<i32: 0>} : vector<17x3072xi32>
    %16 = vector.broadcast %5 : vector<1x3072xi32> to vector<17x3072xi32>
    %17 = arith.cmpi eq, %15, %16 : vector<17x3072xi32>
    %cst_4 = arith.constant 0.000000e+00 : f32
    %18 = vector.broadcast %cst_4 : f32 to vector<17x3072xf32>
    %19 = arith.select %17, %0, %18 : vector<17x3072xi1>, vector<17x3072xf32>
    %cst_5 = arith.constant dense<0.000000e+00> : vector<3072xf32>
    %20 = vector.multi_reduction <add>, %19, %cst_5 [0] : vector<17x3072xf32> to vector<3072xf32>
    %21 = vector.shape_cast %20 : vector<3072xf32> to vector<1x3072xf32>
    %22 = arith.subf %14, %21 : vector<1x3072xf32>
    %c0_6 = arith.constant 0 : index
    %c0_7 = arith.constant 0 : index
    %23 = vector.load %arg4[%c0_6, %c0_7] : memref<1x3072xf32, #tpu.memory_space<vmem>>, vector<1x3072xf32>
    %24 = arith.mulf %22, %23 : vector<1x3072xf32>
    %c3072_i32 = arith.constant 3072 : i32
    %25 = arith.muli %arg0, %c3072_i32 : i32
    %26 = tpu.iota {dimensions = array<i32: 1>} : vector<1x3072xi32>
    %27 = vector.broadcast %25 : i32 to vector<1x3072xi32>
    %28 = arith.addi %27, %26 : vector<1x3072xi32>
    %c0_8 = arith.constant 0 : index
    %29 = memref.load %arg1[%c0_8] : memref<1xi32, #tpu.memory_space<smem>>
    %30 = vector.broadcast %29 : i32 to vector<1x3072xi32>
    %31 = arith.cmpi slt, %28, %30 : vector<1x3072xi32>
    %cst_9 = arith.constant 0.000000e+00 : f32
    %32 = vector.broadcast %cst_9 : f32 to vector<1x3072xf32>
    %33 = arith.select %31, %24, %32 : vector<1x3072xi1>, vector<1x3072xf32>
    %34 = vector.shape_cast %33 : vector<1x3072xf32> to vector<1x1x3072xf32>
    %cst_10 = arith.constant dense<0.000000e+00> : vector<1xf32>
    %35 = vector.multi_reduction <add>, %34, %cst_10 [1, 2] : vector<1x1x3072xf32> to vector<1xf32>
    %36 = vector.shape_cast %35 : vector<1xf32> to vector<1x1x1xf32>
    %37 = vector.extract %36[0, 0, 0] : f32 from vector<1x1x1xf32>
    %38 = vector.broadcast %37 : f32 to vector<1x8x128xf32>
    %c0_11 = arith.constant 0 : index
    %c0_12 = arith.constant 0 : index
    %c0_13 = arith.constant 0 : index
    %39 = vector.load %arg5[%c0_11, %c0_12, %c0_13] : memref<1x8x128xf32, #tpu.memory_space<vmem>>, vector<1x8x128xf32>
    tpu.vector_store %arg5[%c0_11, %c0_12, %c0_13], %38 {strides = array<i32>} : memref<1x8x128xf32, #tpu.memory_space<vmem>>, vector<1x8x128xf32>,
    return
  }
  func.func @transform_0(%arg0: i32, %arg1: memref<1xi32, #tpu.memory_space<smem>>) -> (i32, i32) {
    %c0_i32 = arith.constant 0 : i32
    %c0_i32_0 = arith.constant 0 : i32
    return %c0_i32, %arg0 : i32, i32
  }
  func.func @transform_1(%arg0: i32, %arg1: memref<1xi32, #tpu.memory_space<smem>>) -> (i32, i32) {
    %c0_i32 = arith.constant 0 : i32
    %c0_i32_0 = arith.constant 0 : i32
    return %c0_i32, %arg0 : i32, i32
  }
  func.func @transform_2(%arg0: i32, %arg1: memref<1xi32, #tpu.memory_space<smem>>) -> (i32, i32) {
    %c0_i32 = arith.constant 0 : i32
    %c0_i32_0 = arith.constant 0 : i32
    return %c0_i32, %arg0 : i32, i32
  }
  func.func @transform_3(%arg0: i32, %arg1: memref<1xi32, #tpu.memory_space<smem>>) -> (i32, i32, i32) {
    %c0_i32 = arith.constant 0 : i32
    %c0_i32_0 = arith.constant 0 : i32
    %c0_i32_1 = arith.constant 0 : i32
    return %arg0, %c0_i32, %c0_i32_0 : i32, i32, i32
  }
}

</mosaic_0001>

<llo_original>
// kernel: tpu_custom_call.1
$region0: #{tpu_custom_call.1}
  #allocation0 [shape = 'u32[]', space=smem, size = 0x4, offset = 0x4, fixed_abs, tag = 'smem constant byte address 0x4 - core index']
  #allocation1 [shape = 'u32[72,128]{1,0:T(1,128)}', space=vmem, size = 0x9000, scoped, tag = 'internal scratch']
  #allocation2 [shape = 's32[1]{0}', space=sflag, size = 0x4, scoped, tag = 'scoped memory for tpu_custom_call.1']
  #allocation3 [shape = 's32[1]{0:T(128)S(6)}', space=smem, size = 0x200, scoped, tag = 'prefetched SMEM operand 0']
  %s0 = inlined_call_operand.<no memory space> [shape: s32[1], index: 0, kind: input, shape index: {}]
  %s1 = inlined_call_operand.hbm [shape: f32[17,3072], index: 1, kind: input, shape index: {}]
  %s2 = inlined_call_operand.hbm [shape: s32[1,3072], index: 2, kind: input, shape index: {}]
  %s3 = inlined_call_operand.hbm [shape: f32[1,3072], index: 3, kind: input, shape index: {}]
  %s4 = inlined_call_operand.hbm [shape: f32[1,8,128], index: 4, kind: output, shape index: {}]
  %s5 = sld [smem:[#allocation0]]
  $region34: #{tpu_custom_call.1} parent=0
    _
  %s7 = ssub.s32 1, %s5
  %s8 = scalar_select 0, %s7, %s5
  %9 = sst [smem:[#allocation3]] %s0
  $region1: #{tpu_custom_call.1} parent=0
    #allocation4 [shape = 'u8[294912]{0}', space=vmem, size = 0x48000, scoped, tag = 'input window, operand 1, single buffered']
    #allocation5 [shape = 's32[1]{0}', space=sflag, size = 0x4, scoped, tag = 'scoped memory for tpu_custom_call.1']
    #allocation6 [shape = 's32[1]{0}', space=sflag, size = 0x4, scoped, tag = 'scoped memory for tpu_custom_call.1']
    #allocation7 [shape = 'u8[12288]{0}', space=vmem, size = 0x3000, scoped, tag = 'input window, operand 2, single buffered']
    #allocation8 [shape = 's32[1]{0}', space=sflag, size = 0x4, scoped, tag = 'scoped memory for tpu_custom_call.1']
    #allocation9 [shape = 'u8[12288]{0}', space=vmem, size = 0x3000, scoped, tag = 'input window, operand 3, single buffered']
    #allocation10 [shape = 'u8[4096]{0}', space=vmem, size = 0x1000, scoped, tag = 'output window, operand 0, single buffered']
    %10 = vsyncpa [#allocation5], 0
    %11 = vsyncpa [#allocation8], 0
    %12 = vsyncpa [#allocation6], 0
    // Predicated region
    $region2: #{tpu_custom_call.1} parent=1 // pred_check
      _
    $region3: #{tpu_custom_call.1} parent=1 // pred_check_branch
      %14 = sbr.rel (0) target = $region5
    $region4: #{tpu_custom_call.1} parent=1 // pred_region
      %16 = vsyncadd [#allocation5], 0
      %s17 = sshll.u32 %s1, 4
      %s18 = int_to_ptr.hbm [resolvable:$true] %s17
      %s19 = sshll.u32 [#allocation4], 4
      %s20 = int_to_ptr.vmem [resolvable:$true] %s19
      %25 = dma.hbm_to_vmem [thread:$0]  %s18, 9216, %s20, [#allocation5], 3072, 3072, 192
    $region5: #{tpu_custom_call.1} parent=1 // pred_fallthru
      _
    // Predicated region
    $region6: #{tpu_custom_call.1} parent=1 // pred_check
      _
    $region7: #{tpu_custom_call.1} parent=1 // pred_check_branch
      %27 = sbr.rel (0) target = $region9
    $region8: #{tpu_custom_call.1} parent=1 // pred_region
      %29 = vsyncadd [#allocation8], 0
      %s31 = sshll.u32 %s2, 4
      %s32 = int_to_ptr.hbm [resolvable:$true] %s31
      %s33 = sshll.u32 [#allocation7], 4
      %s34 = int_to_ptr.vmem [resolvable:$true] %s33
      %36 = dma.hbm_to_vmem [thread:$0]  %s32, 384, %s34, [#allocation8]
    $region9: #{tpu_custom_call.1} parent=1 // pred_fallthru
      _
    // Predicated region
    $region10: #{tpu_custom_call.1} parent=1 // pred_check
      _
    $region11: #{tpu_custom_call.1} parent=1 // pred_check_branch
      %38 = sbr.rel (0) target = $region13
    $region12: #{tpu_custom_call.1} parent=1 // pred_region
      %40 = vsyncadd [#allocation8], 0
      %s42 = sshll.u32 %s3, 4
      %s43 = int_to_ptr.hbm [resolvable:$true] %s42
      %s44 = sshll.u32 [#allocation9], 4
      %s45 = int_to_ptr.vmem [resolvable:$true] %s44
      %47 = dma.hbm_to_vmem [thread:$0]  %s43, 384, %s45, [#allocation8]
    $region13: #{tpu_custom_call.1} parent=1 // pred_fallthru
      _
    // Predicated region
    $region14: #{tpu_custom_call.1} parent=1 // pred_check
      _
    $region15: #{tpu_custom_call.1} parent=1 // pred_check_branch
      %49 = sbr.rel (0) target = $region17
    $region16: #{tpu_custom_call.1} parent=1 // pred_region
      %51 = dma.done [#allocation5], 9216
    $region17: #{tpu_custom_call.1} parent=1 // pred_fallthru
      _
    // Predicated region
    $region18: #{tpu_custom_call.1} parent=1 // pred_check
      _
    $region19: #{tpu_custom_call.1} parent=1 // pred_check_branch
      %53 = sbr.rel (0) target = $region21
    $region20: #{tpu_custom_call.1} parent=1 // pred_region
      %55 = dma.done [#allocation8], 384
    $region21: #{tpu_custom_call.1} parent=1 // pred_fallthru
      _
    // Predicated region
    $region22: #{tpu_custom_call.1} parent=1 // pred_check
      _
    $region23: #{tpu_custom_call.1} parent=1 // pred_check_branch
      %57 = sbr.rel (0) target = $region25
    $region24: #{tpu_custom_call.1} parent=1 // pred_region
      %59 = dma.done [#allocation8], 384
    $region25: #{tpu_custom_call.1} parent=1 // pred_fallthru
      _
    %v60 = vld [vmem:[#allocation4] sm:$0xff]
    %v61 = vld [vmem:[#allocation4 + $0x8] sm:$0xff]
    %v62 = vld [vmem:[#allocation4 + $0x10] sm:$0xff]
    %v63 = vld [vmem:[#allocation4 + $0x18] sm:$0xff]
    %v64 = vld [vmem:[#allocation4 + $0x20] sm:$0xff]
    %v65 = vld [vmem:[#allocation4 + $0x28] sm:$0xff]
    %v66 = vld [vmem:[#allocation4 + $0x30] sm:$0xff]
    %v67 = vld [vmem:[#allocation4 + $0x38] sm:$0xff]
    %v68 = vld [vmem:[#allocation4 + $0x40] sm:$0xff]
    %v69 = vld [vmem:[#allocation4 + $0x48] sm:$0xff]
    %v70 = vld [vmem:[#allocation4 + $0x50] sm:$0xff]
    %v71 = vld [vmem:[#allocation4 + $0x58] sm:$0xff]
    %v72 = vld [vmem:[#allocation4 + $0x60] sm:$0xff]
    %v73 = vld [vmem:[#allocation4 + $0x68] sm:$0xff]
    %v74 = vld [vmem:[#allocation4 + $0x70] sm:$0xff]
    %v75 = vld [vmem:[#allocation4 + $0x78] sm:$0xff]
    %v76 = vld [vmem:[#allocation4 + $0x80] sm:$0xff]
    %v77 = vld [vmem:[#allocation4 + $0x88] sm:$0xff]
    %v78 = vld [vmem:[#allocation4 + $0x90] sm:$0xff]
    %v79 = vld [vmem:[#allocation4 + $0x98] sm:$0xff]
    %v80 = vld [vmem:[#allocation4 + $0xa0] sm:$0xff]
    %v81 = vld [vmem:[#allocation4 + $0xa8] sm:$0xff]
    %v82 = vld [vmem:[#allocation4 + $0xb0] sm:$0xff]
    %v83 = vld [vmem:[#allocation4 + $0xb8] sm:$0xff]
    %v84 = vld [vmem:[#allocation4 + $0xc0] sm:$0xff]
    %v85 = vld [vmem:[#allocation4 + $0xc8] sm:$0xff]
    %v86 = vld [vmem:[#allocation4 + $0xd0] sm:$0xff]
    %v87 = vld [vmem:[#allocation4 + $0xd8] sm:$0xff]
    %v88 = vld [vmem:[#allocation4 + $0xe0] sm:$0xff]
    %v89 = vld [vmem:[#allocation4 + $0xe8] sm:$0xff]
    %v90 = vld [vmem:[#allocation4 + $0xf0] sm:$0xff]
    %v91 = vld [vmem:[#allocation4 + $0xf8] sm:$0xff]
    %v92 = vld [vmem:[#allocation4 + $0x100] sm:$0xff]
    %v93 = vld [vmem:[#allocation4 + $0x108] sm:$0xff]
    %v94 = vld [vmem:[#allocation4 + $0x110] sm:$0xff]
    %v95 = vld [vmem:[#allocation4 + $0x118] sm:$0xff]
    %v96 = vld [vmem:[#allocation4 + $0x120] sm:$0xff]
    %v97 = vld [vmem:[#allocation4 + $0x128] sm:$0xff]
    %v98 = vld [vmem:[#allocation4 + $0x130] sm:$0xff]
    %v99 = vld [vmem:[#allocation4 + $0x138] sm:$0xff]
    %v100 = vld [vmem:[#allocation4 + $0x140] sm:$0xff]
    %v101 = vld [vmem:[#allocation4 + $0x148] sm:$0xff]
    %v102 = vld [vmem:[#allocation4 + $0x150] sm:$0xff]
    %v103 = vld [vmem:[#allocation4 + $0x158] sm:$0xff]
    %v104 = vld [vmem:[#allocation4 + $0x160] sm:$0xff]
    %v105 = vld [vmem:[#allocation4 + $0x168] sm:$0xff]
    %v106 = vld [vmem:[#allocation4 + $0x170] sm:$0xff]
    %v107 = vld [vmem:[#allocation4 + $0x178] sm:$0xff]
    %v108 = vld [vmem:[#allocation4 + $0x180] sm:$0x1]
    %v109 = vld [vmem:[#allocation4 + $0x188] sm:$0x1]
    %v110 = vld [vmem:[#allocation4 + $0x190] sm:$0x1]
    %v111 = vld [vmem:[#allocation4 + $0x198] sm:$0x1]
    %v112 = vld [vmem:[#allocation4 + $0x1a0] sm:$0x1]
    %v113 = vld [vmem:[#allocation4 + $0x1a8] sm:$0x1]
    %v114 = vld [vmem:[#allocation4 + $0x1b0] sm:$0x1]
    %v115 = vld [vmem:[#allocation4 + $0x1b8] sm:$0x1]
    %v116 = vld [vmem:[#allocation4 + $0x1c0] sm:$0x1]
    %v117 = vld [vmem:[#allocation4 + $0x1c8] sm:$0x1]
    %v118 = vld [vmem:[#allocation4 + $0x1d0] sm:$0x1]
    %v119 = vld [vmem:[#allocation4 + $0x1d8] sm:$0x1]
    %v120 = vld [vmem:[#allocation4 + $0x1e0] sm:$0x1]
    %v121 = vld [vmem:[#allocation4 + $0x1e8] sm:$0x1]
    %v122 = vld [vmem:[#allocation4 + $0x1f0] sm:$0x1]
    %v123 = vld [vmem:[#allocation4 + $0x1f8] sm:$0x1]
    %v124 = vld [vmem:[#allocation4 + $0x200] sm:$0x1]
    %v125 = vld [vmem:[#allocation4 + $0x208] sm:$0x1]
    %v126 = vld [vmem:[#allocation4 + $0x210] sm:$0x1]
    %v127 = vld [vmem:[#allocation4 + $0x218] sm:$0x1]
    %v128 = vld [vmem:[#allocation4 + $0x220] sm:$0x1]
    %v129 = vld [vmem:[#allocation4 + $0x228] sm:$0x1]
    %v130 = vld [vmem:[#allocation4 + $0x230] sm:$0x1]
    %v131 = vld [vmem:[#allocation4 + $0x238] sm:$0x1]
    %v132 = vld [vmem:[#allocation7] sm:$0xff]
    %v133 = vld [vmem:[#allocation7 + $0x8] sm:$0xff]
    %v134 = vld [vmem:[#allocation7 + $0x10] sm:$0xff]
    %vm135 = vcmp.gt.s32.totalorder %v132, 0
    %v136 = vsel %vm135, %v132, 0
    %vm137 = vcmp.gt.s32.totalorder %v133, 0
    %v138 = vsel %vm137, %v133, 0
    %vm139 = vcmp.gt.s32.totalorder %v134, 0
    %v140 = vsel %vm139, %v134, 0
    %vm141 = vcmp.lt.s32.totalorder %v136, 16
    %v142 = vsel %vm141, %v136, 16
    %vm143 = vcmp.lt.s32.totalorder %v138, 16
    %v144 = vsel %vm143, %v138, 16
    %vm145 = vcmp.lt.s32.totalorder %v140, 16
    %v146 = vsel %vm145, %v140, 16
    %v147 = vmax.f32 %v60, %v84
    %vm148 = vcmask 1040384
    %v149 = vsel %vm148, %v108, -inf
    %v150 = vmax.f32 %v147, %v149
    %v151 = vrot.slane %v150, 4
    %v152 = vmax.f32 %v150, %v151
    %v153 = vrot.slane %v152, 2
    %v154 = vmax.f32 %v152, %v153
    %v155 = vrot.slane %v154, 1
    %v156 = vmax.f32 %v154, %v155
    %v157 = vmax.f32 %v61, %v85
    %v158 = vsel %vm148, %v109, -inf
    %v159 = vmax.f32 %v157, %v158
    %v160 = vrot.slane %v159, 4
    %v161 = vmax.f32 %v159, %v160
    %v162 = vrot.slane %v161, 2
    %v163 = vmax.f32 %v161, %v162
    %v164 = vrot.slane %v163, 1
    %v165 = vmax.f32 %v163, %v164
    %v166 = vmax.f32 %v62, %v86
    %v167 = vsel %vm148, %v110, -inf
    %v168 = vmax.f32 %v166, %v167
    %v169 = vrot.slane %v168, 4
    %v170 = vmax.f32 %v168, %v169
    %v171 = vrot.slane %v170, 2
    %v172 = vmax.f32 %v170, %v171
    %v173 = vrot.slane %v172, 1
    %v174 = vmax.f32 %v172, %v173
    %v175 = vmax.f32 %v63, %v87
    %v176 = vsel %vm148, %v111, -inf
    %v177 = vmax.f32 %v175, %v176
    %v178 = vrot.slane %v177, 4
    %v179 = vmax.f32 %v177, %v178
    %v180 = vrot.slane %v179, 2
    %v181 = vmax.f32 %v179, %v180
    %v182 = vrot.slane %v181, 1
    %v183 = vmax.f32 %v181, %v182
    %v184 = vmax.f32 %v64, %v88
    %v185 = vsel %vm148, %v112, -inf
    %v186 = vmax.f32 %v184, %v185
    %v187 = vrot.slane %v186, 4
    %v188 = vmax.f32 %v186, %v187
    %v189 = vrot.slane %v188, 2
    %v190 = vmax.f32 %v188, %v189
    %v191 = vrot.slane %v190, 1
    %v192 = vmax.f32 %v190, %v191
    %v193 = vmax.f32 %v65, %v89
    %v194 = vsel %vm148, %v113, -inf
    %v195 = vmax.f32 %v193, %v194
    %v196 = vrot.slane %v195, 4
    %v197 = vmax.f32 %v195, %v196
    %v198 = vrot.slane %v197, 2
    %v199 = vmax.f32 %v197, %v198
    %v200 = vrot.slane %v199, 1
    %v201 = vmax.f32 %v199, %v200
    %v202 = vmax.f32 %v66, %v90
    %v203 = vsel %vm148, %v114, -inf
    %v204 = vmax.f32 %v202, %v203
    %v205 = vrot.slane %v204, 4
    %v206 = vmax.f32 %v204, %v205
    %v207 = vrot.slane %v206, 2
    %v208 = vmax.f32 %v206, %v207
    %v209 = vrot.slane %v208, 1
    %v210 = vmax.f32 %v208, %v209
    %v211 = vmax.f32 %v67, %v91
    %v212 = vsel %vm148, %v115, -inf
    %v213 = vmax.f32 %v211, %v212
    %v214 = vrot.slane %v213, 4
    %v215 = vmax.f32 %v213, %v214
    %v216 = vrot.slane %v215, 2
    %v217 = vmax.f32 %v215, %v216
    %v218 = vrot.slane %v217, 1
    %v219 = vmax.f32 %v217, %v218
    %v220 = vmax.f32 %v68, %v92
    %v221 = vsel %vm148, %v116, -inf
    %v222 = vmax.f32 %v220, %v221
    %v223 = vrot.slane %v222, 4
    %v224 = vmax.f32 %v222, %v223
    %v225 = vrot.slane %v224, 2
    %v226 = vmax.f32 %v224, %v225
    %v227 = vrot.slane %v226, 1
    %v228 = vmax.f32 %v226, %v227
    %v229 = vmax.f32 %v69, %v93
    %v230 = vsel %vm148, %v117, -inf
    %v231 = vmax.f32 %v229, %v230
    %v232 = vrot.slane %v231, 4
    %v233 = vmax.f32 %v231, %v232
    %v234 = vrot.slane %v233, 2
    %v235 = vmax.f32 %v233, %v234
    %v236 = vrot.slane %v235, 1
    %v237 = vmax.f32 %v235, %v236
    %v238 = vmax.f32 %v70, %v94
    %v239 = vsel %vm148, %v118, -inf
    %v240 = vmax.f32 %v238, %v239
    %v241 = vrot.slane %v240, 4
    %v242 = vmax.f32 %v240, %v241
    %v243 = vrot.slane %v242, 2
    %v244 = vmax.f32 %v242, %v243
    %v245 = vrot.slane %v244, 1
    %v246 = vmax.f32 %v244, %v245
    %v247 = vmax.f32 %v71, %v95
    %v248 = vsel %vm148, %v119, -inf
    %v249 = vmax.f32 %v247, %v248
    %v250 = vrot.slane %v249, 4
    %v251 = vmax.f32 %v249, %v250
    %v252 = vrot.slane %v251, 2
    %v253 = vmax.f32 %v251, %v252
    %v254 = vrot.slane %v253, 1
    %v255 = vmax.f32 %v253, %v254
    %v256 = vmax.f32 %v72, %v96
    %v257 = vsel %vm148, %v120, -inf
    %v258 = vmax.f32 %v256, %v257
    %v259 = vrot.slane %v258, 4
    %v260 = vmax.f32 %v258, %v259
    %v261 = vrot.slane %v260, 2
    %v262 = vmax.f32 %v260, %v261
    %v263 = vrot.slane %v262, 1
    %v264 = vmax.f32 %v262, %v263
    %v265 = vmax.f32 %v73, %v97
    %v266 = vsel %vm148, %v121, -inf
    %v267 = vmax.f32 %v265, %v266
    %v268 = vrot.slane %v267, 4
    %v269 = vmax.f32 %v267, %v268
    %v270 = vrot.slane %v269, 2
    %v271 = vmax.f32 %v269, %v270
    %v272 = vrot.slane %v271, 1
    %v273 = vmax.f32 %v271, %v272
    %v274 = vmax.f32 %v74, %v98
    %v275 = vsel %vm148, %v122, -inf
    %v276 = vmax.f32 %v274, %v275
    %v277 = vrot.slane %v276, 4
    %v278 = vmax.f32 %v276, %v277
    %v279 = vrot.slane %v278, 2
    %v280 = vmax.f32 %v278, %v279
    %v281 = vrot.slane %v280, 1
    %v282 = vmax.f32 %v280, %v281
    %v283 = vmax.f32 %v75, %v99
    %v284 = vsel %vm148, %v123, -inf
    %v285 = vmax.f32 %v283, %v284
    %v286 = vrot.slane %v285, 4
    %v287 = vmax.f32 %v285, %v286
    %v288 = vrot.slane %v287, 2
    %v289 = vmax.f32 %v287, %v288
    %v290 = vrot.slane %v289, 1
    %v291 = vmax.f32 %v289, %v290
    %v292 = vmax.f32 %v76, %v100
    %v293 = vsel %vm148, %v124, -inf
    %v294 = vmax.f32 %v292, %v293
    %v295 = vrot.slane %v294, 4
    %v296 = vmax.f32 %v294, %v295
    %v297 = vrot.slane %v296, 2
    %v298 = vmax.f32 %v296, %v297
    %v299 = vrot.slane %v298, 1
    %v300 = vmax.f32 %v298, %v299
    %v301 = vmax.f32 %v77, %v101
    %v302 = vsel %vm148, %v125, -inf
    %v303 = vmax.f32 %v301, %v302
    %v304 = vrot.slane %v303, 4
    %v305 = vmax.f32 %v303, %v304
    %v306 = vrot.slane %v305, 2
    %v307 = vmax.f32 %v305, %v306
    %v308 = vrot.slane %v307, 1
    %v309 = vmax.f32 %v307, %v308
    %v310 = vmax.f32 %v78, %v102
    %v311 = vsel %vm148, %v126, -inf
    %v312 = vmax.f32 %v310, %v311
    %v313 = vrot.slane %v312, 4
    %v314 = vmax.f32 %v312, %v313
    %v315 = vrot.slane %v314, 2
    %v316 = vmax.f32 %v314, %v315
    %v317 = vrot.slane %v316, 1
    %v318 = vmax.f32 %v316, %v317
    %v319 = vmax.f32 %v79, %v103
    %v320 = vsel %vm148, %v127, -inf
    %v321 = vmax.f32 %v319, %v320
    %v322 = vrot.slane %v321, 4
    %v323 = vmax.f32 %v321, %v322
    %v324 = vrot.slane %v323, 2
    %v325 = vmax.f32 %v323, %v324
    %v326 = vrot.slane %v325, 1
    %v327 = vmax.f32 %v325, %v326
    %v328 = vmax.f32 %v80, %v104
    %v329 = vsel %vm148, %v128, -inf
    %v330 = vmax.f32 %v328, %v329
    %v331 = vrot.slane %v330, 4
    %v332 = vmax.f32 %v330, %v331
    %v333 = vrot.slane %v332, 2
    %v334 = vmax.f32 %v332, %v333
    %v335 = vrot.slane %v334, 1
    %v336 = vmax.f32 %v334, %v335
    %v337 = vmax.f32 %v81, %v105
    %v338 = vsel %vm148, %v129, -inf
    %v339 = vmax.f32 %v337, %v338
    %v340 = vrot.slane %v339, 4
    %v341 = vmax.f32 %v339, %v340
    %v342 = vrot.slane %v341, 2
    %v343 = vmax.f32 %v341, %v342
    %v344 = vrot.slane %v343, 1
    %v345 = vmax.f32 %v343, %v344
    %v346 = vmax.f32 %v82, %v106
    %v347 = vsel %vm148, %v130, -inf
    %v348 = vmax.f32 %v346, %v347
    %v349 = vrot.slane %v348, 4
    %v350 = vmax.f32 %v348, %v349
    %v351 = vrot.slane %v350, 2
    %v352 = vmax.f32 %v350, %v351
    %v353 = vrot.slane %v352, 1
    %v354 = vmax.f32 %v352, %v353
    %v355 = vmax.f32 %v83, %v107
    %v356 = vsel %vm148, %v131, -inf
    %v357 = vmax.f32 %v355, %v356
    %v358 = vrot.slane %v357, 4
    %v359 = vmax.f32 %v357, %v358
    %v360 = vrot.slane %v359, 2
    %v361 = vmax.f32 %v359, %v360
    %v362 = vrot.slane %v361, 1
    %v363 = vmax.f32 %v361, %v362
    %v364 = vsub.f32 %v60, %v156
    %v365 = vsub.f32 %v61, %v165
    %v366 = vsub.f32 %v62, %v174
    %v367 = vsub.f32 %v63, %v183
    %v368 = vsub.f32 %v64, %v192
    %v369 = vsub.f32 %v65, %v201
    %v370 = vsub.f32 %v66, %v210
    %v371 = vsub.f32 %v67, %v219
    %v372 = vsub.f32 %v68, %v228
    %v373 = vsub.f32 %v69, %v237
    %v374 = vsub.f32 %v70, %v246
    %v375 = vsub.f32 %v71, %v255
    %v376 = vsub.f32 %v72, %v264
    %v377 = vsub.f32 %v73, %v273
    %v378 = vsub.f32 %v74, %v282
    %v379 = vsub.f32 %v75, %v291
    %v380 = vsub.f32 %v76, %v300
    %v381 = vsub.f32 %v77, %v309
    %v382 = vsub.f32 %v78, %v318
    %v383 = vsub.f32 %v79, %v327
    %v384 = vsub.f32 %v80, %v336
    %v385 = vsub.f32 %v81, %v345
    %v386 = vsub.f32 %v82, %v354
    %v387 = vsub.f32 %v83, %v363
    %v388 = vsub.f32 %v84, %v156
    %v389 = vsub.f32 %v85, %v165
    %v390 = vsub.f32 %v86, %v174
    %v391 = vsub.f32 %v87, %v183
    %v392 = vsub.f32 %v88, %v192
    %v393 = vsub.f32 %v89, %v201
    %v394 = vsub.f32 %v90, %v210
    %v395 = vsub.f32 %v91, %v219
    %v396 = vsub.f32 %v92, %v228
    %v397 = vsub.f32 %v93, %v237
    %v398 = vsub.f32 %v94, %v246
    %v399 = vsub.f32 %v95, %v255
    %v400 = vsub.f32 %v96, %v264
    %v401 = vsub.f32 %v97, %v273
    %v402 = vsub.f32 %v98, %v282
    %v403 = vsub.f32 %v99, %v291
    %v404 = vsub.f32 %v100, %v300
    %v405 = vsub.f32 %v101, %v309
    %v406 = vsub.f32 %v102, %v318
    %v407 = vsub.f32 %v103, %v327
    %v408 = vsub.f32 %v104, %v336
    %v409 = vsub.f32 %v105, %v345
    %v410 = vsub.f32 %v106, %v354
    %v411 = vsub.f32 %v107, %v363
    %v412 = vsub.f32 %v108, %v156
    %v413 = vsub.f32 %v109, %v165
    %v414 = vsub.f32 %v110, %v174
    %v415 = vsub.f32 %v111, %v183
    %v416 = vsub.f32 %v112, %v192
    %v417 = vsub.f32 %v113, %v201
    %v418 = vsub.f32 %v114, %v210
    %v419 = vsub.f32 %v115, %v219
    %v420 = vsub.f32 %v116, %v228
    %v421 = vsub.f32 %v117, %v237
    %v422 = vsub.f32 %v118, %v246
    %v423 = vsub.f32 %v119, %v255
    %v424 = vsub.f32 %v120, %v264
    %v425 = vsub.f32 %v121, %v273
    %v426 = vsub.f32 %v122, %v282
    %v427 = vsub.f32 %v123, %v291
    %v428 = vsub.f32 %v124, %v300
    %v429 = vsub.f32 %v125, %v309
    %v430 = vsub.f32 %v126, %v318
    %v431 = vsub.f32 %v127, %v327
    %v432 = vsub.f32 %v128, %v336
    %v433 = vsub.f32 %v129, %v345
    %v434 = vsub.f32 %v130, %v354
    %v435 = vsub.f32 %v131, %v363
    %v436 = vmul.f32 %v364, 1.442695
    %v437 = vpow.pop %v436
    %v438 = vmul.f32 %v365, 1.442695
    %v439 = vpow.pop %v438
    %v440 = vmul.f32 %v366, 1.442695
    %v441 = vpow.pop %v440
    %v442 = vmul.f32 %v367, 1.442695
    %v443 = vpow.pop %v442
    %v444 = vmul.f32 %v368, 1.442695
    %v445 = vpow.pop %v444
    %v446 = vmul.f32 %v369, 1.442695
    %v447 = vpow.pop %v446
    %v448 = vmul.f32 %v370, 1.442695
    %v449 = vpow.pop %v448
    %v450 = vmul.f32 %v371, 1.442695
    %v451 = vpow.pop %v450
    %v452 = vmul.f32 %v372, 1.442695
    %v453 = vpow.pop %v452
    %v454 = vmul.f32 %v373, 1.442695
    %v455 = vpow.pop %v454
    %v456 = vmul.f32 %v374, 1.442695
    %v457 = vpow.pop %v456
    %v458 = vmul.f32 %v375, 1.442695
    %v459 = vpow.pop %v458
    %v460 = vmul.f32 %v376, 1.442695
    %v461 = vpow.pop %v460
    %v462 = vmul.f32 %v377, 1.442695
    %v463 = vpow.pop %v462
    %v464 = vmul.f32 %v378, 1.442695
    %v465 = vpow.pop %v464
    %v466 = vmul.f32 %v379, 1.442695
    %v467 = vpow.pop %v466
    %v468 = vmul.f32 %v380, 1.442695
    %v469 = vpow.pop %v468
    %v470 = vmul.f32 %v381, 1.442695
    %v471 = vpow.pop %v470
    %v472 = vmul.f32 %v382, 1.442695
    %v473 = vpow.pop %v472
    %v474 = vmul.f32 %v383, 1.442695
    %v475 = vpow.pop %v474
    %v476 = vmul.f32 %v384, 1.442695
    %v477 = vpow.pop %v476
    %v478 = vmul.f32 %v385, 1.442695
    %v479 = vpow.pop %v478
    %v480 = vmul.f32 %v386, 1.442695
    %v481 = vpow.pop %v480
    %v482 = vmul.f32 %v387, 1.442695
    %v483 = vpow.pop %v482
    %v484 = vmul.f32 %v388, 1.442695
    %v485 = vpow.pop %v484
    %v486 = vmul.f32 %v389, 1.442695
    %v487 = vpow.pop %v486
    %v488 = vmul.f32 %v390, 1.442695
    %v489 = vpow.pop %v488
    %v490 = vmul.f32 %v391, 1.442695
    %v491 = vpow.pop %v490
    %v492 = vmul.f32 %v392, 1.442695
    %v493 = vpow.pop %v492
    %v494 = vmul.f32 %v393, 1.442695
    %v495 = vpow.pop %v494
    %v496 = vmul.f32 %v394, 1.442695
    %v497 = vpow.pop %v496
    %v498 = vmul.f32 %v395, 1.442695
    %v499 = vpow.pop %v498
    %v500 = vmul.f32 %v396, 1.442695
    %v501 = vpow.pop %v500
    %v502 = vmul.f32 %v397, 1.442695
    %v503 = vpow.pop %v502
    %v504 = vmul.f32 %v398, 1.442695
    %v505 = vpow.pop %v504
    %v506 = vmul.f32 %v399, 1.442695
    %v507 = vpow.pop %v506
    %v508 = vmul.f32 %v400, 1.442695
    %v509 = vpow.pop %v508
    %v510 = vmul.f32 %v401, 1.442695
    %v511 = vpow.pop %v510
    %v512 = vmul.f32 %v402, 1.442695
    %v513 = vpow.pop %v512
    %v514 = vmul.f32 %v403, 1.442695
    %v515 = vpow.pop %v514
    %v516 = vmul.f32 %v404, 1.442695
    %v517 = vpow.pop %v516
    %v518 = vmul.f32 %v405, 1.442695
    %v519 = vpow.pop %v518
    %v520 = vmul.f32 %v406, 1.442695
    %v521 = vpow.pop %v520
    %v522 = vmul.f32 %v407, 1.442695
    %v523 = vpow.pop %v522
    %v524 = vmul.f32 %v408, 1.442695
    %v525 = vpow.pop %v524
    %v526 = vmul.f32 %v409, 1.442695
    %v527 = vpow.pop %v526
    %v528 = vmul.f32 %v410, 1.442695
    %v529 = vpow.pop %v528
    %v530 = vmul.f32 %v411, 1.442695
    %v531 = vpow.pop %v530
    %v532 = vmul.f32 %v412, 1.442695
    %v533 = vpow.pop %v532
    %v534 = vmul.f32 %v413, 1.442695
    %v535 = vpow.pop %v534
    %v536 = vmul.f32 %v414, 1.442695
    %v537 = vpow.pop %v536
    %v538 = vmul.f32 %v415, 1.442695
    %v539 = vpow.pop %v538
    %v540 = vmul.f32 %v416, 1.442695
    %v541 = vpow.pop %v540
    %v542 = vmul.f32 %v417, 1.442695
    %v543 = vpow.pop %v542
    %v544 = vmul.f32 %v418, 1.442695
    %v545 = vpow.pop %v544
    %v546 = vmul.f32 %v419, 1.442695
    %v547 = vpow.pop %v546
    %v548 = vmul.f32 %v420, 1.442695
    %v549 = vpow.pop %v548
    %v550 = vmul.f32 %v421, 1.442695
    %v551 = vpow.pop %v550
    %v552 = vmul.f32 %v422, 1.442695
    %v553 = vpow.pop %v552
    %v554 = vmul.f32 %v423, 1.442695
    %v555 = vpow.pop %v554
    %v556 = vmul.f32 %v424, 1.442695
    %v557 = vpow.pop %v556
    %v558 = vmul.f32 %v425, 1.442695
    %v559 = vpow.pop %v558
    %v560 = vmul.f32 %v426, 1.442695
    %v561 = vpow.pop %v560
    %v562 = vmul.f32 %v427, 1.442695
    %v563 = vpow.pop %v562
    %v564 = vmul.f32 %v428, 1.442695
    %v565 = vpow.pop %v564
    %v566 = vmul.f32 %v429, 1.442695
    %v567 = vpow.pop %v566
    %v568 = vmul.f32 %v430, 1.442695
    %v569 = vpow.pop %v568
    %v570 = vmul.f32 %v431, 1.442695
    %v571 = vpow.pop %v570
    %v572 = vmul.f32 %v432, 1.442695
    %v573 = vpow.pop %v572
    %v574 = vmul.f32 %v433, 1.442695
    %v575 = vpow.pop %v574
    %v576 = vmul.f32 %v434, 1.442695
    %v577 = vpow.pop %v576
    %v578 = vmul.f32 %v435, 1.442695
    %v579 = vpow.pop %v578
    %v580 = vadd.f32 %v437, %v485
    %v581 = vsel %vm148, %v533, 0.0
    %v582 = vadd.f32 %v580, %v581
    %v583 = vrot.slane %v582, 4
    %v584 = vadd.f32 %v582, %v583
    %v585 = vrot.slane %v584, 2
    %v586 = vadd.f32 %v584, %v585
    %v587 = vrot.slane %v586, 1
    %v588 = vadd.f32 %v586, %v587
    %v589 = vadd.f32 %v439, %v487
    %v590 = vsel %vm148, %v535, 0.0
    %v591 = vadd.f32 %v589, %v590
    %v592 = vrot.slane %v591, 4
    %v593 = vadd.f32 %v591, %v592
    %v594 = vrot.slane %v593, 2
    %v595 = vadd.f32 %v593, %v594
    %v596 = vrot.slane %v595, 1
    %v597 = vadd.f32 %v595, %v596
    %v598 = vadd.f32 %v441, %v489
    %v599 = vsel %vm148, %v537, 0.0
    %v600 = vadd.f32 %v598, %v599
    %v601 = vrot.slane %v600, 4
    %v602 = vadd.f32 %v600, %v601
    %v603 = vrot.slane %v602, 2
    %v604 = vadd.f32 %v602, %v603
    %v605 = vrot.slane %v604, 1
    %v606 = vadd.f32 %v604, %v605
    %v607 = vadd.f32 %v443, %v491
    %v608 = vsel %vm148, %v539, 0.0
    %v609 = vadd.f32 %v607, %v608
    %v610 = vrot.slane %v609, 4
    %v611 = vadd.f32 %v609, %v610
    %v612 = vrot.slane %v611, 2
    %v613 = vadd.f32 %v611, %v612
    %v614 = vrot.slane %v613, 1
    %v615 = vadd.f32 %v613, %v614
    %v616 = vadd.f32 %v445, %v493
    %v617 = vsel %vm148, %v541, 0.0
    %v618 = vadd.f32 %v616, %v617
    %v619 = vrot.slane %v618, 4
    %v620 = vadd.f32 %v618, %v619
    %v621 = vrot.slane %v620, 2
    %v622 = vadd.f32 %v620, %v621
    %v623 = vrot.slane %v622, 1
    %v624 = vadd.f32 %v622, %v623
    %v625 = vadd.f32 %v447, %v495
    %v626 = vsel %vm148, %v543, 0.0
    %v627 = vadd.f32 %v625, %v626
    %v628 = vrot.slane %v627, 4
    %v629 = vadd.f32 %v627, %v628
    %v630 = vrot.slane %v629, 2
    %v631 = vadd.f32 %v629, %v630
    %v632 = vrot.slane %v631, 1
    %v633 = vadd.f32 %v631, %v632
    %v634 = vadd.f32 %v449, %v497
    %v635 = vsel %vm148, %v545, 0.0
    %v636 = vadd.f32 %v634, %v635
    %v637 = vrot.slane %v636, 4
    %v638 = vadd.f32 %v636, %v637
    %v639 = vrot.slane %v638, 2
    %v640 = vadd.f32 %v638, %v639
    %v641 = vrot.slane %v640, 1
    %v642 = vadd.f32 %v640, %v641
    %v643 = vadd.f32 %v451, %v499
    %v644 = vsel %vm148, %v547, 0.0
    %v645 = vadd.f32 %v643, %v644
    %v646 = vrot.slane %v645, 4
    %v647 = vadd.f32 %v645, %v646
    %v648 = vrot.slane %v647, 2
    %v649 = vadd.f32 %v647, %v648
    %v650 = vrot.slane %v649, 1
    %v651 = vadd.f32 %v649, %v650
    %v652 = vadd.f32 %v453, %v501
    %v653 = vsel %vm148, %v549, 0.0
    %v654 = vadd.f32 %v652, %v653
    %v655 = vrot.slane %v654, 4
    %v656 = vadd.f32 %v654, %v655
    %v657 = vrot.slane %v656, 2
    %v658 = vadd.f32 %v656, %v657
    %v659 = vrot.slane %v658, 1
    %v660 = vadd.f32 %v658, %v659
    %v661 = vadd.f32 %v455, %v503
    %v662 = vsel %vm148, %v551, 0.0
    %v663 = vadd.f32 %v661, %v662
    %v664 = vrot.slane %v663, 4
    %v665 = vadd.f32 %v663, %v664
    %v666 = vrot.slane %v665, 2
    %v667 = vadd.f32 %v665, %v666
    %v668 = vrot.slane %v667, 1
    %v669 = vadd.f32 %v667, %v668
    %v670 = vadd.f32 %v457, %v505
    %v671 = vsel %vm148, %v553, 0.0
    %v672 = vadd.f32 %v670, %v671
    %v673 = vrot.slane %v672, 4
    %v674 = vadd.f32 %v672, %v673
    %v675 = vrot.slane %v674, 2
    %v676 = vadd.f32 %v674, %v675
    %v677 = vrot.slane %v676, 1
    %v678 = vadd.f32 %v676, %v677
    %v679 = vadd.f32 %v459, %v507
    %v680 = vsel %vm148, %v555, 0.0
    %v681 = vadd.f32 %v679, %v680
    %v682 = vrot.slane %v681, 4
    %v683 = vadd.f32 %v681, %v682
    %v684 = vrot.slane %v683, 2
    %v685 = vadd.f32 %v683, %v684
    %v686 = vrot.slane %v685, 1
    %v687 = vadd.f32 %v685, %v686
    %v688 = vadd.f32 %v461, %v509
    %v689 = vsel %vm148, %v557, 0.0
    %v690 = vadd.f32 %v688, %v689
    %v691 = vrot.slane %v690, 4
    %v692 = vadd.f32 %v690, %v691
    %v693 = vrot.slane %v692, 2
    %v694 = vadd.f32 %v692, %v693
    %v695 = vrot.slane %v694, 1
    %v696 = vadd.f32 %v694, %v695
    %v697 = vadd.f32 %v463, %v511
    %v698 = vsel %vm148, %v559, 0.0
    %v699 = vadd.f32 %v697, %v698
    %v700 = vrot.slane %v699, 4
    %v701 = vadd.f32 %v699, %v700
    %v702 = vrot.slane %v701, 2
    %v703 = vadd.f32 %v701, %v702
    %v704 = vrot.slane %v703, 1
    %v705 = vadd.f32 %v703, %v704
    %v706 = vadd.f32 %v465, %v513
    %v707 = vsel %vm148, %v561, 0.0
    %v708 = vadd.f32 %v706, %v707
    %v709 = vrot.slane %v708, 4
    %v710 = vadd.f32 %v708, %v709
    %v711 = vrot.slane %v710, 2
    %v712 = vadd.f32 %v710, %v711
    %v713 = vrot.slane %v712, 1
    %v714 = vadd.f32 %v712, %v713
    %v715 = vadd.f32 %v467, %v515
    %v716 = vsel %vm148, %v563, 0.0
    %v717 = vadd.f32 %v715, %v716
    %v718 = vrot.slane %v717, 4
    %v719 = vadd.f32 %v717, %v718
    %v720 = vrot.slane %v719, 2
    %v721 = vadd.f32 %v719, %v720
    %v722 = vrot.slane %v721, 1
    %v723 = vadd.f32 %v721, %v722
    %v724 = vadd.f32 %v469, %v517
    %v725 = vsel %vm148, %v565, 0.0
    %v726 = vadd.f32 %v724, %v725
    %v727 = vrot.slane %v726, 4
    %v728 = vadd.f32 %v726, %v727
    %v729 = vrot.slane %v728, 2
    %v730 = vadd.f32 %v728, %v729
    %v731 = vrot.slane %v730, 1
    %v732 = vadd.f32 %v730, %v731
    %v733 = vadd.f32 %v471, %v519
    %v734 = vsel %vm148, %v567, 0.0
    %v735 = vadd.f32 %v733, %v734
    %v736 = vrot.slane %v735, 4
    %v737 = vadd.f32 %v735, %v736
    %v738 = vrot.slane %v737, 2
    %v739 = vadd.f32 %v737, %v738
    %v740 = vrot.slane %v739, 1
    %v741 = vadd.f32 %v739, %v740
    %v742 = vadd.f32 %v473, %v521
    %v743 = vsel %vm148, %v569, 0.0
    %v744 = vadd.f32 %v742, %v743
    %v745 = vrot.slane %v744, 4
    %v746 = vadd.f32 %v744, %v745
    %v747 = vrot.slane %v746, 2
    %v748 = vadd.f32 %v746, %v747
    %v749 = vrot.slane %v748, 1
    %v750 = vadd.f32 %v748, %v749
    %v751 = vadd.f32 %v475, %v523
    %v752 = vsel %vm148, %v571, 0.0
    %v753 = vadd.f32 %v751, %v752
    %v754 = vrot.slane %v753, 4
    %v755 = vadd.f32 %v753, %v754
    %v756 = vrot.slane %v755, 2
    %v757 = vadd.f32 %v755, %v756
    %v758 = vrot.slane %v757, 1
    %v759 = vadd.f32 %v757, %v758
    %v760 = vadd.f32 %v477, %v525
    %v761 = vsel %vm148, %v573, 0.0
    %v762 = vadd.f32 %v760, %v761
    %v763 = vrot.slane %v762, 4
    %v764 = vadd.f32 %v762, %v763
    %v765 = vrot.slane %v764, 2
    %v766 = vadd.f32 %v764, %v765
    %v767 = vrot.slane %v766, 1
    %v768 = vadd.f32 %v766, %v767
    %v769 = vadd.f32 %v479, %v527
    %v770 = vsel %vm148, %v575, 0.0
    %v771 = vadd.f32 %v769, %v770
    %v772 = vrot.slane %v771, 4
    %v773 = vadd.f32 %v771, %v772
    %v774 = vrot.slane %v773, 2
    %v775 = vadd.f32 %v773, %v774
    %v776 = vrot.slane %v775, 1
    %v777 = vadd.f32 %v775, %v776
    %v778 = vadd.f32 %v481, %v529
    %v779 = vsel %vm148, %v577, 0.0
    %v780 = vadd.f32 %v778, %v779
    %v781 = vrot.slane %v780, 4
    %v782 = vadd.f32 %v780, %v781
    %v783 = vrot.slane %v782, 2
    %v784 = vadd.f32 %v782, %v783
    %v785 = vrot.slane %v784, 1
    %v786 = vadd.f32 %v784, %v785
    %v787 = vadd.f32 %v483, %v531
    %v788 = vsel %vm148, %v579, 0.0
    %v789 = vadd.f32 %v787, %v788
    %v790 = vrot.slane %v789, 4
    %v791 = vadd.f32 %v789, %v790
    %v792 = vrot.slane %v791, 2
    %v793 = vadd.f32 %v791, %v792
    %v794 = vrot.slane %v793, 1
    %v795 = vadd.f32 %v793, %v794
    %v796 = vlog2.pop %v588
    %v797 = vmul.f32 %v796, 0.6931472
    %v798 = vlog2.pop %v597
    %v799 = vmul.f32 %v798, 0.6931472
    %v800 = vlog2.pop %v606
    %v801 = vmul.f32 %v800, 0.6931472
    %v802 = vlog2.pop %v615
    %v803 = vmul.f32 %v802, 0.6931472
    %v804 = vlog2.pop %v624
    %v805 = vmul.f32 %v804, 0.6931472
    %v806 = vlog2.pop %v633
    %v807 = vmul.f32 %v806, 0.6931472
    %v808 = vlog2.pop %v642
    %v809 = vmul.f32 %v808, 0.6931472
    %v810 = vlog2.pop %v651
    %v811 = vmul.f32 %v810, 0.6931472
    %v812 = vlog2.pop %v660
    %v813 = vmul.f32 %v812, 0.6931472
    %v814 = vlog2.pop %v669
    %v815 = vmul.f32 %v814, 0.6931472
    %v816 = vlog2.pop %v678
    %v817 = vmul.f32 %v816, 0.6931472
    %v818 = vlog2.pop %v687
    %v819 = vmul.f32 %v818, 0.6931472
    %v820 = vlog2.pop %v696
    %v821 = vmul.f32 %v820, 0.6931472
    %v822 = vlog2.pop %v705
    %v823 = vmul.f32 %v822, 0.6931472
    %v824 = vlog2.pop %v714
    %v825 = vmul.f32 %v824, 0.6931472
    %v826 = vlog2.pop %v723
    %v827 = vmul.f32 %v826, 0.6931472
    %v828 = vlog2.pop %v732
    %v829 = vmul.f32 %v828, 0.6931472
    %v830 = vlog2.pop %v741
    %v831 = vmul.f32 %v830, 0.6931472
    %v832 = vlog2.pop %v750
    %v833 = vmul.f32 %v832, 0.6931472
    %v834 = vlog2.pop %v759
    %v835 = vmul.f32 %v834, 0.6931472
    %v836 = vlog2.pop %v768
    %v837 = vmul.f32 %v836, 0.6931472
    %v838 = vlog2.pop %v777
    %v839 = vmul.f32 %v838, 0.6931472
    %v840 = vlog2.pop %v786
    %v841 = vmul.f32 %v840, 0.6931472
    %v842 = vlog2.pop %v795
    %v843 = vmul.f32 %v842, 0.6931472
    %v844 = vadd.f32 %v156, %v797
    %v845 = vadd.f32 %v165, %v799
    %v846 = vadd.f32 %v174, %v801
    %v847 = vadd.f32 %v183, %v803
    %v848 = vadd.f32 %v192, %v805
    %v849 = vadd.f32 %v201, %v807
    %v850 = vadd.f32 %v210, %v809
    %v851 = vadd.f32 %v219, %v811
    %v852 = vadd.f32 %v228, %v813
    %v853 = vadd.f32 %v237, %v815
    %v854 = vadd.f32 %v246, %v817
    %v855 = vadd.f32 %v255, %v819
    %v856 = vadd.f32 %v264, %v821
    %v857 = vadd.f32 %v273, %v823
    %v858 = vadd.f32 %v282, %v825
    %v859 = vadd.f32 %v291, %v827
    %v860 = vadd.f32 %v300, %v829
    %v861 = vadd.f32 %v309, %v831
    %v862 = vadd.f32 %v318, %v833
    %v863 = vadd.f32 %v327, %v835
    %v864 = vadd.f32 %v336, %v837
    %v865 = vadd.f32 %v345, %v839
    %v866 = vadd.f32 %v354, %v841
    %v867 = vadd.f32 %v363, %v843
    %v868 = vlaneseq
    %v869 = vshrl.u32 %v868, 7
    %v870 = vadd.s32 %v869, 8
    %v871 = vadd.s32 %v869, 16
    %v872 = vperm.slane %v142, 0
    %v873 = vperm.slane %v142, 1
    %v874 = vperm.slane %v142, 2
    %v875 = vperm.slane %v142, 3
    %v876 = vperm.slane %v142, 4
    %v877 = vperm.slane %v142, 5
    %v878 = vperm.slane %v142, 6
    %v879 = vperm.slane %v142, 7
    %v880 = vperm.slane %v144, 0
    %v881 = vperm.slane %v144, 1
    %v882 = vperm.slane %v144, 2
    %v883 = vperm.slane %v144, 3
    %v884 = vperm.slane %v144, 4
    %v885 = vperm.slane %v144, 5
    %v886 = vperm.slane %v144, 6
    %v887 = vperm.slane %v144, 7
    %v888 = vperm.slane %v146, 0
    %v889 = vperm.slane %v146, 1
    %v890 = vperm.slane %v146, 2
    %v891 = vperm.slane %v146, 3
    %v892 = vperm.slane %v146, 4
    %v893 = vperm.slane %v146, 5
    %v894 = vperm.slane %v146, 6
    %v895 = vperm.slane %v146, 7
    %vm896 = vcmp.eq.s32.totalorder %v869, %v872
    %vm897 = vcmp.eq.s32.totalorder %v869, %v873
    %vm898 = vcmp.eq.s32.totalorder %v869, %v874
    %vm899 = vcmp.eq.s32.totalorder %v869, %v875
    %vm900 = vcmp.eq.s32.totalorder %v869, %v876
    %vm901 = vcmp.eq.s32.totalorder %v869, %v877
    %vm902 = vcmp.eq.s32.totalorder %v869, %v878
    %vm903 = vcmp.eq.s32.totalorder %v869, %v879
    %vm904 = vcmp.eq.s32.totalorder %v869, %v880
    %vm905 = vcmp.eq.s32.totalorder %v869, %v881
    %vm906 = vcmp.eq.s32.totalorder %v869, %v882
    %vm907 = vcmp.eq.s32.totalorder %v869, %v883
    %vm908 = vcmp.eq.s32.totalorder %v869, %v884
    %vm909 = vcmp.eq.s32.totalorder %v869, %v885
    %vm910 = vcmp.eq.s32.totalorder %v869, %v886
    %vm911 = vcmp.eq.s32.totalorder %v869, %v887
    %vm912 = vcmp.eq.s32.totalorder %v869, %v888
    %vm913 = vcmp.eq.s32.totalorder %v869, %v889
    %vm914 = vcmp.eq.s32.totalorder %v869, %v890
    %vm915 = vcmp.eq.s32.totalorder %v869, %v891
    %vm916 = vcmp.eq.s32.totalorder %v869, %v892
    %vm917 = vcmp.eq.s32.totalorder %v869, %v893
    %vm918 = vcmp.eq.s32.totalorder %v869, %v894
    %vm919 = vcmp.eq.s32.totalorder %v869, %v895
    %vm920 = vcmp.eq.s32.totalorder %v870, %v872
    %vm921 = vcmp.eq.s32.totalorder %v870, %v873
    %vm922 = vcmp.eq.s32.totalorder %v870, %v874
    %vm923 = vcmp.eq.s32.totalorder %v870, %v875
    %vm924 = vcmp.eq.s32.totalorder %v870, %v876
    %vm925 = vcmp.eq.s32.totalorder %v870, %v877
    %vm926 = vcmp.eq.s32.totalorder %v870, %v878
    %vm927 = vcmp.eq.s32.totalorder %v870, %v879
    %vm928 = vcmp.eq.s32.totalorder %v870, %v880
    %vm929 = vcmp.eq.s32.totalorder %v870, %v881
    %vm930 = vcmp.eq.s32.totalorder %v870, %v882
    %vm931 = vcmp.eq.s32.totalorder %v870, %v883
    %vm932 = vcmp.eq.s32.totalorder %v870, %v884
    %vm933 = vcmp.eq.s32.totalorder %v870, %v885
    %vm934 = vcmp.eq.s32.totalorder %v870, %v886
    %vm935 = vcmp.eq.s32.totalorder %v870, %v887
    %vm936 = vcmp.eq.s32.totalorder %v870, %v888
    %vm937 = vcmp.eq.s32.totalorder %v870, %v889
    %vm938 = vcmp.eq.s32.totalorder %v870, %v890
    %vm939 = vcmp.eq.s32.totalorder %v870, %v891
    %vm940 = vcmp.eq.s32.totalorder %v870, %v892
    %vm941 = vcmp.eq.s32.totalorder %v870, %v893
    %vm942 = vcmp.eq.s32.totalorder %v870, %v894
    %vm943 = vcmp.eq.s32.totalorder %v870, %v895
    %vm944 = vcmp.eq.s32.totalorder %v871, %v872
    %vm945 = vcmp.eq.s32.totalorder %v871, %v873
    %vm946 = vcmp.eq.s32.totalorder %v871, %v874
    %vm947 = vcmp.eq.s32.totalorder %v871, %v875
    %vm948 = vcmp.eq.s32.totalorder %v871, %v876
    %vm949 = vcmp.eq.s32.totalorder %v871, %v877
    %vm950 = vcmp.eq.s32.totalorder %v871, %v878
    %vm951 = vcmp.eq.s32.totalorder %v871, %v879
    %vm952 = vcmp.eq.s32.totalorder %v871, %v880
    %vm953 = vcmp.eq.s32.totalorder %v871, %v881
    %vm954 = vcmp.eq.s32.totalorder %v871, %v882
    %vm955 = vcmp.eq.s32.totalorder %v871, %v883
    %vm956 = vcmp.eq.s32.totalorder %v871, %v884
    %vm957 = vcmp.eq.s32.totalorder %v871, %v885
    %vm958 = vcmp.eq.s32.totalorder %v871, %v886
    %vm959 = vcmp.eq.s32.totalorder %v871, %v887
    %vm960 = vcmp.eq.s32.totalorder %v871, %v888
    %vm961 = vcmp.eq.s32.totalorder %v871, %v889
    %vm962 = vcmp.eq.s32.totalorder %v871, %v890
    %vm963 = vcmp.eq.s32.totalorder %v871, %v891
    %vm964 = vcmp.eq.s32.totalorder %v871, %v892
    %vm965 = vcmp.eq.s32.totalorder %v871, %v893
    %vm966 = vcmp.eq.s32.totalorder %v871, %v894
    %vm967 = vcmp.eq.s32.totalorder %v871, %v895
    %v968 = vsel %vm896, %v60, 0.0
    %v969 = vsel %vm897, %v61, 0.0
    %v970 = vsel %vm898, %v62, 0.0
    %v971 = vsel %vm899, %v63, 0.0
    %v972 = vsel %vm900, %v64, 0.0
    %v973 = vsel %vm901, %v65, 0.0
    %v974 = vsel %vm902, %v66, 0.0
    %v975 = vsel %vm903, %v67, 0.0
    %v976 = vsel %vm904, %v68, 0.0
    %v977 = vsel %vm905, %v69, 0.0
    %v978 = vsel %vm906, %v70, 0.0
    %v979 = vsel %vm907, %v71, 0.0
    %v980 = vsel %vm908, %v72, 0.0
    %v981 = vsel %vm909, %v73, 0.0
    %v982 = vsel %vm910, %v74, 0.0
    %v983 = vsel %vm911, %v75, 0.0
    %v984 = vsel %vm912, %v76, 0.0
    %v985 = vsel %vm913, %v77, 0.0
    %v986 = vsel %vm914, %v78, 0.0
    %v987 = vsel %vm915, %v79, 0.0
    %v988 = vsel %vm916, %v80, 0.0
    %v989 = vsel %vm917, %v81, 0.0
    %v990 = vsel %vm918, %v82, 0.0
    %v991 = vsel %vm919, %v83, 0.0
    %v992 = vsel %vm920, %v84, 0.0
    %v993 = vsel %vm921, %v85, 0.0
    %v994 = vsel %vm922, %v86, 0.0
    %v995 = vsel %vm923, %v87, 0.0
    %v996 = vsel %vm924, %v88, 0.0
    %v997 = vsel %vm925, %v89, 0.0
    %v998 = vsel %vm926, %v90, 0.0
    %v999 = vsel %vm927, %v91, 0.0
    %v1000 = vsel %vm928, %v92, 0.0
    %v1001 = vsel %vm929, %v93, 0.0
    %v1002 = vsel %vm930, %v94, 0.0
    %v1003 = vsel %vm931, %v95, 0.0
    %v1004 = vsel %vm932, %v96, 0.0
    %v1005 = vsel %vm933, %v97, 0.0
    %v1006 = vsel %vm934, %v98, 0.0
    %v1007 = vsel %vm935, %v99, 0.0
    %v1008 = vsel %vm936, %v100, 0.0
    %v1009 = vsel %vm937, %v101, 0.0
    %v1010 = vsel %vm938, %v102, 0.0
    %v1011 = vsel %vm939, %v103, 0.0
    %v1012 = vsel %vm940, %v104, 0.0
    %v1013 = vsel %vm941, %v105, 0.0
    %v1014 = vsel %vm942, %v106, 0.0
    %v1015 = vsel %vm943, %v107, 0.0
    %v1016 = vsel %vm944, %v108, 0.0
    %v1017 = vsel %vm945, %v109, 0.0
    %v1018 = vsel %vm946, %v110, 0.0
    %v1019 = vsel %vm947, %v111, 0.0
    %v1020 = vsel %vm948, %v112, 0.0
    %v1021 = vsel %vm949, %v113, 0.0
    %v1022 = vsel %vm950, %v114, 0.0
    %v1023 = vsel %vm951, %v115, 0.0
    %v1024 = vsel %vm952, %v116, 0.0
    %v1025 = vsel %vm953, %v117, 0.0
    %v1026 = vsel %vm954, %v118, 0.0
    %v1027 = vsel %vm955, %v119, 0.0
    %v1028 = vsel %vm956, %v120, 0.0
    %v1029 = vsel %vm957, %v121, 0.0
    %v1030 = vsel %vm958, %v122, 0.0
    %v1031 = vsel %vm959, %v123, 0.0
    %v1032 = vsel %vm960, %v124, 0.0
    %v1033 = vsel %vm961, %v125, 0.0
    %v1034 = vsel %vm962, %v126, 0.0
    %v1035 = vsel %vm963, %v127, 0.0
    %v1036 = vsel %vm964, %v128, 0.0
    %v1037 = vsel %vm965, %v129, 0.0
    %v1038 = vsel %vm966, %v130, 0.0
    %v1039 = vsel %vm967, %v131, 0.0
    %v1040 = vadd.f32 %v968, %v992
    %v1041 = vsel %vm148, %v1016, 0.0
    %v1042 = vadd.f32 %v1040, %v1041
    %v1043 = vrot.slane %v1042, 4
    %v1044 = vadd.f32 %v1042, %v1043
    %v1045 = vrot.slane %v1044, 2
    %v1046 = vadd.f32 %v1044, %v1045
    %v1047 = vrot.slane %v1046, 1
    %v1048 = vadd.f32 %v1046, %v1047
    %v1049 = vadd.f32 %v969, %v993
    %v1050 = vsel %vm148, %v1017, 0.0
    %v1051 = vadd.f32 %v1049, %v1050
    %v1052 = vrot.slane %v1051, 4
    %v1053 = vadd.f32 %v1051, %v1052
    %v1054 = vrot.slane %v1053, 2
    %v1055 = vadd.f32 %v1053, %v1054
    %v1056 = vrot.slane %v1055, 1
    %v1057 = vadd.f32 %v1055, %v1056
    %v1058 = vadd.f32 %v970, %v994
    %v1059 = vsel %vm148, %v1018, 0.0
    %v1060 = vadd.f32 %v1058, %v1059
    %v1061 = vrot.slane %v1060, 4
    %v1062 = vadd.f32 %v1060, %v1061
    %v1063 = vrot.slane %v1062, 2
    %v1064 = vadd.f32 %v1062, %v1063
    %v1065 = vrot.slane %v1064, 1
    %v1066 = vadd.f32 %v1064, %v1065
    %v1067 = vadd.f32 %v971, %v995
    %v1068 = vsel %vm148, %v1019, 0.0
    %v1069 = vadd.f32 %v1067, %v1068
    %v1070 = vrot.slane %v1069, 4
    %v1071 = vadd.f32 %v1069, %v1070
    %v1072 = vrot.slane %v1071, 2
    %v1073 = vadd.f32 %v1071, %v1072
    %v1074 = vrot.slane %v1073, 1
    %v1075 = vadd.f32 %v1073, %v1074
    %v1076 = vadd.f32 %v972, %v996
    %v1077 = vsel %vm148, %v1020, 0.0
    %v1078 = vadd.f32 %v1076, %v1077
    %v1079 = vrot.slane %v1078, 4
    %v1080 = vadd.f32 %v1078, %v1079
    %v1081 = vrot.slane %v1080, 2
    %v1082 = vadd.f32 %v1080, %v1081
    %v1083 = vrot.slane %v1082, 1
    %v1084 = vadd.f32 %v1082, %v1083
    %v1085 = vadd.f32 %v973, %v997
    %v1086 = vsel %vm148, %v1021, 0.0
    %v1087 = vadd.f32 %v1085, %v1086
    %v1088 = vrot.slane %v1087, 4
    %v1089 = vadd.f32 %v1087, %v1088
    %v1090 = vrot.slane %v1089, 2
    %v1091 = vadd.f32 %v1089, %v1090
    %v1092 = vrot.slane %v1091, 1
    %v1093 = vadd.f32 %v1091, %v1092
    %v1094 = vadd.f32 %v974, %v998
    %v1095 = vsel %vm148, %v1022, 0.0
    %v1096 = vadd.f32 %v1094, %v1095
    %v1097 = vrot.slane %v1096, 4
    %v1098 = vadd.f32 %v1096, %v1097
    %v1099 = vrot.slane %v1098, 2
    %v1100 = vadd.f32 %v1098, %v1099
    %v1101 = vrot.slane %v1100, 1
    %v1102 = vadd.f32 %v1100, %v1101
    %v1103 = vadd.f32 %v975, %v999
    %v1104 = vsel %vm148, %v1023, 0.0
    %v1105 = vadd.f32 %v1103, %v1104
    %v1106 = vrot.slane %v1105, 4
    %v1107 = vadd.f32 %v1105, %v1106
    %v1108 = vrot.slane %v1107, 2
    %v1109 = vadd.f32 %v1107, %v1108
    %v1110 = vrot.slane %v1109, 1
    %v1111 = vadd.f32 %v1109, %v1110
    %v1112 = vadd.f32 %v976, %v1000
    %v1113 = vsel %vm148, %v1024, 0.0
    %v1114 = vadd.f32 %v1112, %v1113
    %v1115 = vrot.slane %v1114, 4
    %v1116 = vadd.f32 %v1114, %v1115
    %v1117 = vrot.slane %v1116, 2
    %v1118 = vadd.f32 %v1116, %v1117
    %v1119 = vrot.slane %v1118, 1
    %v1120 = vadd.f32 %v1118, %v1119
    %v1121 = vadd.f32 %v977, %v1001
    %v1122 = vsel %vm148, %v1025, 0.0
    %v1123 = vadd.f32 %v1121, %v1122
    %v1124 = vrot.slane %v1123, 4
    %v1125 = vadd.f32 %v1123, %v1124
    %v1126 = vrot.slane %v1125, 2
    %v1127 = vadd.f32 %v1125, %v1126
    %v1128 = vrot.slane %v1127, 1
    %v1129 = vadd.f32 %v1127, %v1128
    %v1130 = vadd.f32 %v978, %v1002
    %v1131 = vsel %vm148, %v1026, 0.0
    %v1132 = vadd.f32 %v1130, %v1131
    %v1133 = vrot.slane %v1132, 4
    %v1134 = vadd.f32 %v1132, %v1133
    %v1135 = vrot.slane %v1134, 2
    %v1136 = vadd.f32 %v1134, %v1135
    %v1137 = vrot.slane %v1136, 1
    %v1138 = vadd.f32 %v1136, %v1137
    %v1139 = vadd.f32 %v979, %v1003
    %v1140 = vsel %vm148, %v1027, 0.0
    %v1141 = vadd.f32 %v1139, %v1140
    %v1142 = vrot.slane %v1141, 4
    %v1143 = vadd.f32 %v1141, %v1142
    %v1144 = vrot.slane %v1143, 2
    %v1145 = vadd.f32 %v1143, %v1144
    %v1146 = vrot.slane %v1145, 1
    %v1147 = vadd.f32 %v1145, %v1146
    %v1148 = vadd.f32 %v980, %v1004
    %v1149 = vsel %vm148, %v1028, 0.0
    %v1150 = vadd.f32 %v1148, %v1149
    %v1151 = vrot.slane %v1150, 4
    %v1152 = vadd.f32 %v1150, %v1151
    %v1153 = vrot.slane %v1152, 2
    %v1154 = vadd.f32 %v1152, %v1153
    %v1155 = vrot.slane %v1154, 1
    %v1156 = vadd.f32 %v1154, %v1155
    %v1157 = vadd.f32 %v981, %v1005
    %v1158 = vsel %vm148, %v1029, 0.0
    %v1159 = vadd.f32 %v1157, %v1158
    %v1160 = vrot.slane %v1159, 4
    %v1161 = vadd.f32 %v1159, %v1160
    %v1162 = vrot.slane %v1161, 2
    %v1163 = vadd.f32 %v1161, %v1162
    %v1164 = vrot.slane %v1163, 1
    %v1165 = vadd.f32 %v1163, %v1164
    %v1166 = vadd.f32 %v982, %v1006
    %v1167 = vsel %vm148, %v1030, 0.0
    %v1168 = vadd.f32 %v1166, %v1167
    %v1169 = vrot.slane %v1168, 4
    %v1170 = vadd.f32 %v1168, %v1169
    %v1171 = vrot.slane %v1170, 2
    %v1172 = vadd.f32 %v1170, %v1171
    %v1173 = vrot.slane %v1172, 1
    %v1174 = vadd.f32 %v1172, %v1173
    %v1175 = vadd.f32 %v983, %v1007
    %v1176 = vsel %vm148, %v1031, 0.0
    %v1177 = vadd.f32 %v1175, %v1176
    %v1178 = vrot.slane %v1177, 4
    %v1179 = vadd.f32 %v1177, %v1178
    %v1180 = vrot.slane %v1179, 2
    %v1181 = vadd.f32 %v1179, %v1180
    %v1182 = vrot.slane %v1181, 1
    %v1183 = vadd.f32 %v1181, %v1182
    %v1184 = vadd.f32 %v984, %v1008
    %v1185 = vsel %vm148, %v1032, 0.0
    %v1186 = vadd.f32 %v1184, %v1185
    %v1187 = vrot.slane %v1186, 4
    %v1188 = vadd.f32 %v1186, %v1187
    %v1189 = vrot.slane %v1188, 2
    %v1190 = vadd.f32 %v1188, %v1189
    %v1191 = vrot.slane %v1190, 1
    %v1192 = vadd.f32 %v1190, %v1191
    %v1193 = vadd.f32 %v985, %v1009
    %v1194 = vsel %vm148, %v1033, 0.0
    %v1195 = vadd.f32 %v1193, %v1194
    %v1196 = vrot.slane %v1195, 4
    %v1197 = vadd.f32 %v1195, %v1196
    %v1198 = vrot.slane %v1197, 2
    %v1199 = vadd.f32 %v1197, %v1198
    %v1200 = vrot.slane %v1199, 1
    %v1201 = vadd.f32 %v1199, %v1200
    %v1202 = vadd.f32 %v986, %v1010
    %v1203 = vsel %vm148, %v1034, 0.0
    %v1204 = vadd.f32 %v1202, %v1203
    %v1205 = vrot.slane %v1204, 4
    %v1206 = vadd.f32 %v1204, %v1205
    %v1207 = vrot.slane %v1206, 2
    %v1208 = vadd.f32 %v1206, %v1207
    %v1209 = vrot.slane %v1208, 1
    %v1210 = vadd.f32 %v1208, %v1209
    %v1211 = vadd.f32 %v987, %v1011
    %v1212 = vsel %vm148, %v1035, 0.0
    %v1213 = vadd.f32 %v1211, %v1212
    %v1214 = vrot.slane %v1213, 4
    %v1215 = vadd.f32 %v1213, %v1214
    %v1216 = vrot.slane %v1215, 2
    %v1217 = vadd.f32 %v1215, %v1216
    %v1218 = vrot.slane %v1217, 1
    %v1219 = vadd.f32 %v1217, %v1218
    %v1220 = vadd.f32 %v988, %v1012
    %v1221 = vsel %vm148, %v1036, 0.0
    %v1222 = vadd.f32 %v1220, %v1221
    %v1223 = vrot.slane %v1222, 4
    %v1224 = vadd.f32 %v1222, %v1223
    %v1225 = vrot.slane %v1224, 2
    %v1226 = vadd.f32 %v1224, %v1225
    %v1227 = vrot.slane %v1226, 1
    %v1228 = vadd.f32 %v1226, %v1227
    %v1229 = vadd.f32 %v989, %v1013
    %v1230 = vsel %vm148, %v1037, 0.0
    %v1231 = vadd.f32 %v1229, %v1230
    %v1232 = vrot.slane %v1231, 4
    %v1233 = vadd.f32 %v1231, %v1232
    %v1234 = vrot.slane %v1233, 2
    %v1235 = vadd.f32 %v1233, %v1234
    %v1236 = vrot.slane %v1235, 1
    %v1237 = vadd.f32 %v1235, %v1236
    %v1238 = vadd.f32 %v990, %v1014
    %v1239 = vsel %vm148, %v1038, 0.0
    %v1240 = vadd.f32 %v1238, %v1239
    %v1241 = vrot.slane %v1240, 4
    %v1242 = vadd.f32 %v1240, %v1241
    %v1243 = vrot.slane %v1242, 2
    %v1244 = vadd.f32 %v1242, %v1243
    %v1245 = vrot.slane %v1244, 1
    %v1246 = vadd.f32 %v1244, %v1245
    %v1247 = vadd.f32 %v991, %v1015
    %v1248 = vsel %vm148, %v1039, 0.0
    %v1249 = vadd.f32 %v1247, %v1248
    %v1250 = vrot.slane %v1249, 4
    %v1251 = vadd.f32 %v1249, %v1250
    %v1252 = vrot.slane %v1251, 2
    %v1253 = vadd.f32 %v1251, %v1252
    %v1254 = vrot.slane %v1253, 1
    %v1255 = vadd.f32 %v1253, %v1254
    %v1256 = vsub.f32 %v844, %v1048
    %v1257 = vsub.f32 %v845, %v1057
    %v1258 = vsub.f32 %v846, %v1066
    %v1259 = vsub.f32 %v847, %v1075
    %v1260 = vsub.f32 %v848, %v1084
    %v1261 = vsub.f32 %v849, %v1093
    %v1262 = vsub.f32 %v850, %v1102
    %v1263 = vsub.f32 %v851, %v1111
    %v1264 = vsub.f32 %v852, %v1120
    %v1265 = vsub.f32 %v853, %v1129
    %v1266 = vsub.f32 %v854, %v1138
    %v1267 = vsub.f32 %v855, %v1147
    %v1268 = vsub.f32 %v856, %v1156
    %v1269 = vsub.f32 %v857, %v1165
    %v1270 = vsub.f32 %v858, %v1174
    %v1271 = vsub.f32 %v859, %v1183
    %v1272 = vsub.f32 %v860, %v1192
    %v1273 = vsub.f32 %v861, %v1201
    %v1274 = vsub.f32 %v862, %v1210
    %v1275 = vsub.f32 %v863, %v1219
    %v1276 = vsub.f32 %v864, %v1228
    %v1277 = vsub.f32 %v865, %v1237
    %v1278 = vsub.f32 %v866, %v1246
    %v1279 = vsub.f32 %v867, %v1255
    %v1280 = vld [vmem:[#allocation9] sm:$0xff]
    %v1281 = vld [vmem:[#allocation9 + $0x8] sm:$0xff]
    %v1282 = vld [vmem:[#allocation9 + $0x10] sm:$0xff]
    %v1286 = vperm.slane %v1280, 0
    %v1287 = vperm.slane %v1280, 1
    %v1288 = vperm.slane %v1280, 2
    %v1289 = vperm.slane %v1280, 3
    %v1290 = vperm.slane %v1280, 4
    %v1291 = vperm.slane %v1280, 5
    %v1292 = vperm.slane %v1280, 6
    %v1293 = vperm.slane %v1280, 7
    %v1294 = vperm.slane %v1281, 0
    %v1295 = vperm.slane %v1281, 1
    %v1296 = vperm.slane %v1281, 2
    %v1297 = vperm.slane %v1281, 3
    %v1298 = vperm.slane %v1281, 4
    %v1299 = vperm.slane %v1281, 5
    %v1300 = vperm.slane %v1281, 6
    %v1301 = vperm.slane %v1281, 7
    %v1302 = vperm.slane %v1282, 0
    %v1303 = vperm.slane %v1282, 1
    %v1304 = vperm.slane %v1282, 2
    %v1305 = vperm.slane %v1282, 3
    %v1306 = vperm.slane %v1282, 4
    %v1307 = vperm.slane %v1282, 5
    %v1308 = vperm.slane %v1282, 6
    %v1309 = vperm.slane %v1282, 7
    %v1334 = vmul.f32 %v1256, %v1286
    %v1335 = vmul.f32 %v1257, %v1287
    %v1336 = vmul.f32 %v1258, %v1288
    %v1337 = vmul.f32 %v1259, %v1289
    %v1338 = vmul.f32 %v1260, %v1290
    %v1339 = vmul.f32 %v1261, %v1291
    %v1340 = vmul.f32 %v1262, %v1292
    %v1341 = vmul.f32 %v1263, %v1293
    %v1342 = vmul.f32 %v1264, %v1294
    %v1343 = vmul.f32 %v1265, %v1295
    %v1344 = vmul.f32 %v1266, %v1296
    %v1345 = vmul.f32 %v1267, %v1297
    %v1346 = vmul.f32 %v1268, %v1298
    %v1347 = vmul.f32 %v1269, %v1299
    %v1348 = vmul.f32 %v1270, %v1300
    %v1349 = vmul.f32 %v1271, %v1301
    %v1350 = vmul.f32 %v1272, %v1302
    %v1351 = vmul.f32 %v1273, %v1303
    %v1352 = vmul.f32 %v1274, %v1304
    %v1353 = vmul.f32 %v1275, %v1305
    %v1354 = vmul.f32 %v1276, %v1306
    %v1355 = vmul.f32 %v1277, %v1307
    %v1356 = vmul.f32 %v1278, %v1308
    %v1357 = vmul.f32 %v1279, %v1309
    %s1358 = smul.u32 0, 3072
    %v1359 = vlaneseq
    %v1360 = vand.u32 %v1359, 127
    %v1361 = vadd.s32 %v1360, 128
    %v1362 = vadd.s32 %v1360, 256
    %v1363 = vadd.s32 %v1360, 384
    %v1364 = vadd.s32 %v1360, 512
    %v1365 = vadd.s32 %v1360, 640
    %v1366 = vadd.s32 %v1360, 768
    %v1367 = vadd.s32 %v1360, 896
    %v1368 = vadd.s32 %v1360, 1024
    %v1369 = vadd.s32 %v1360, 1152
    %v1370 = vadd.s32 %v1360, 1280
    %v1371 = vadd.s32 %v1360, 1408
    %v1372 = vadd.s32 %v1360, 1536
    %v1373 = vadd.s32 %v1360, 1664
    %v1374 = vadd.s32 %v1360, 1792
    %v1375 = vadd.s32 %v1360, 1920
    %v1376 = vadd.s32 %v1360, 2048
    %v1377 = vadd.s32 %v1360, 2176
    %v1378 = vadd.s32 %v1360, 2304
    %v1379 = vadd.s32 %v1360, 2432
    %v1380 = vadd.s32 %v1360, 2560
    %v1381 = vadd.s32 %v1360, 2688
    %v1382 = vadd.s32 %v1360, 2816
    %v1383 = vadd.s32 %v1360, 2944
    %v1384 = vstv %s1358
    %v1385 = vadd.s32 %v1384, %v1360
    %v1386 = vadd.s32 %v1384, %v1361
    %v1387 = vadd.s32 %v1384, %v1362
    %v1388 = vadd.s32 %v1384, %v1363
    %v1389 = vadd.s32 %v1384, %v1364
    %v1390 = vadd.s32 %v1384, %v1365
    %v1391 = vadd.s32 %v1384, %v1366
    %v1392 = vadd.s32 %v1384, %v1367
    %v1393 = vadd.s32 %v1384, %v1368
    %v1394 = vadd.s32 %v1384, %v1369
    %v1395 = vadd.s32 %v1384, %v1370
    %v1396 = vadd.s32 %v1384, %v1371
    %v1397 = vadd.s32 %v1384, %v1372
    %v1398 = vadd.s32 %v1384, %v1373
    %v1399 = vadd.s32 %v1384, %v1374
    %v1400 = vadd.s32 %v1384, %v1375
    %v1401 = vadd.s32 %v1384, %v1376
    %v1402 = vadd.s32 %v1384, %v1377
    %v1403 = vadd.s32 %v1384, %v1378
    %v1404 = vadd.s32 %v1384, %v1379
    %v1405 = vadd.s32 %v1384, %v1380
    %v1406 = vadd.s32 %v1384, %v1381
    %v1407 = vadd.s32 %v1384, %v1382
    %v1408 = vadd.s32 %v1384, %v1383
    %s1409 = sld [smem:[#allocation3]]
    %v1410 = vstv %s1409
    %vm1411 = vcmp.lt.s32.totalorder %v1385, %v1410
    %vm1412 = vcmp.lt.s32.totalorder %v1386, %v1410
    %vm1413 = vcmp.lt.s32.totalorder %v1387, %v1410
    %vm1414 = vcmp.lt.s32.totalorder %v1388, %v1410
    %vm1415 = vcmp.lt.s32.totalorder %v1389, %v1410
    %vm1416 = vcmp.lt.s32.totalorder %v1390, %v1410
    %vm1417 = vcmp.lt.s32.totalorder %v1391, %v1410
    %vm1418 = vcmp.lt.s32.totalorder %v1392, %v1410
    %vm1419 = vcmp.lt.s32.totalorder %v1393, %v1410
    %vm1420 = vcmp.lt.s32.totalorder %v1394, %v1410
    %vm1421 = vcmp.lt.s32.totalorder %v1395, %v1410
    %vm1422 = vcmp.lt.s32.totalorder %v1396, %v1410
    %vm1423 = vcmp.lt.s32.totalorder %v1397, %v1410
    %vm1424 = vcmp.lt.s32.totalorder %v1398, %v1410
    %vm1425 = vcmp.lt.s32.totalorder %v1399, %v1410
    %vm1426 = vcmp.lt.s32.totalorder %v1400, %v1410
    %vm1427 = vcmp.lt.s32.totalorder %v1401, %v1410
    %vm1428 = vcmp.lt.s32.totalorder %v1402, %v1410
    %vm1429 = vcmp.lt.s32.totalorder %v1403, %v1410
    %vm1430 = vcmp.lt.s32.totalorder %v1404, %v1410
    %vm1431 = vcmp.lt.s32.totalorder %v1405, %v1410
    %vm1432 = vcmp.lt.s32.totalorder %v1406, %v1410
    %vm1433 = vcmp.lt.s32.totalorder %v1407, %v1410
    %vm1434 = vcmp.lt.s32.totalorder %v1408, %v1410
    %v1435 = vsel %vm1411, %v1334, 0.0
    %v1436 = vsel %vm1412, %v1335, 0.0
    %v1437 = vsel %vm1413, %v1336, 0.0
    %v1438 = vsel %vm1414, %v1337, 0.0
    %v1439 = vsel %vm1415, %v1338, 0.0
    %v1440 = vsel %vm1416, %v1339, 0.0
    %v1441 = vsel %vm1417, %v1340, 0.0
    %v1442 = vsel %vm1418, %v1341, 0.0
    %v1443 = vsel %vm1419, %v1342, 0.0
    %v1444 = vsel %vm1420, %v1343, 0.0
    %v1445 = vsel %vm1421, %v1344, 0.0
    %v1446 = vsel %vm1422, %v1345, 0.0
    %v1447 = vsel %vm1423, %v1346, 0.0
    %v1448 = vsel %vm1424, %v1347, 0.0
    %v1449 = vsel %vm1425, %v1348, 0.0
    %v1450 = vsel %vm1426, %v1349, 0.0
    %v1451 = vsel %vm1427, %v1350, 0.0
    %v1452 = vsel %vm1428, %v1351, 0.0
    %v1453 = vsel %vm1429, %v1352, 0.0
    %v1454 = vsel %vm1430, %v1353, 0.0
    %v1455 = vsel %vm1431, %v1354, 0.0
    %v1456 = vsel %vm1432, %v1355, 0.0
    %v1457 = vsel %vm1433, %v1356, 0.0
    %v1458 = vsel %vm1434, %v1357, 0.0
    %v1459 = vsel %vm148, %v1435, 0.0
    %v1460 = vsel %vm148, %v1436, 0.0
    %v1461 = vadd.f32 %v1459, %v1460
    %v1462 = vsel %vm148, %v1437, 0.0
    %v1463 = vadd.f32 %v1461, %v1462
    %v1464 = vsel %vm148, %v1438, 0.0
    %v1465 = vadd.f32 %v1463, %v1464
    %v1466 = vsel %vm148, %v1439, 0.0
    %v1467 = vadd.f32 %v1465, %v1466
    %v1468 = vsel %vm148, %v1440, 0.0
    %v1469 = vadd.f32 %v1467, %v1468
    %v1470 = vsel %vm148, %v1441, 0.0
    %v1471 = vadd.f32 %v1469, %v1470
    %v1472 = vsel %vm148, %v1442, 0.0
    %v1473 = vadd.f32 %v1471, %v1472
    %v1474 = vsel %vm148, %v1443, 0.0
    %v1475 = vadd.f32 %v1473, %v1474
    %v1476 = vsel %vm148, %v1444, 0.0
    %v1477 = vadd.f32 %v1475, %v1476
    %v1478 = vsel %vm148, %v1445, 0.0
    %v1479 = vadd.f32 %v1477, %v1478
    %v1480 = vsel %vm148, %v1446, 0.0
    %v1481 = vadd.f32 %v1479, %v1480
    %v1482 = vsel %vm148, %v1447, 0.0
    %v1483 = vadd.f32 %v1481, %v1482
    %v1484 = vsel %vm148, %v1448, 0.0
    %v1485 = vadd.f32 %v1483, %v1484
    %v1486 = vsel %vm148, %v1449, 0.0
    %v1487 = vadd.f32 %v1485, %v1486
    %v1488 = vsel %vm148, %v1450, 0.0
    %v1489 = vadd.f32 %v1487, %v1488
    %v1490 = vsel %vm148, %v1451, 0.0
    %v1491 = vadd.f32 %v1489, %v1490
    %v1492 = vsel %vm148, %v1452, 0.0
    %v1493 = vadd.f32 %v1491, %v1492
    %v1494 = vsel %vm148, %v1453, 0.0
    %v1495 = vadd.f32 %v1493, %v1494
    %v1496 = vsel %vm148, %v1454, 0.0
    %v1497 = vadd.f32 %v1495, %v1496
    %v1498 = vsel %vm148, %v1455, 0.0
    %v1499 = vadd.f32 %v1497, %v1498
    %v1500 = vsel %vm148, %v1456, 0.0
    %v1501 = vadd.f32 %v1499, %v1500
    %v1502 = vsel %vm148, %v1457, 0.0
    %v1503 = vadd.f32 %v1501, %v1502
    %v1504 = vsel %vm148, %v1458, 0.0
    %v1505 = vadd.f32 %v1503, %v1504
    %1506 = vadd.xlane.f32.xlu0 %v1505
    %v1507 = vpop.xlane.xlu0 %1506
    %v1508 = vrot.slane %v1507, 4
    %v1509 = vadd.f32 %v1507, %v1508
    %v1510 = vrot.slane %v1509, 2
    %v1511 = vadd.f32 %v1509, %v1510
    %v1512 = vrot.slane %v1511, 1
    %v1513 = vadd.f32 %v1511, %v1512
    %s1514 = vtos %v1513
    %v1515 = vstv %s1514
    %1516 = vst [vmem:[#allocation10] sm:$0xff] %v1515
    // Predicated region
    $region26: #{tpu_custom_call.1} parent=1 // pred_check
      _
    $region27: #{tpu_custom_call.1} parent=1 // pred_check_branch
      %1518 = sbr.rel (0) target = $region29
    $region28: #{tpu_custom_call.1} parent=1 // pred_region
      %1520 = vsyncadd [#allocation6], 0
      %s1522 = sshll.u32 [#allocation10], 4
      %s1523 = int_to_ptr.vmem [resolvable:$true] %s1522
      %s1524 = sshll.u32 %s4, 4
      %s1525 = int_to_ptr.hbm [resolvable:$true] %s1524
      %1527 = dma.vmem_to_hbm [thread:$0]  %s1523, 128, %s1525, [#allocation6]
    $region29: #{tpu_custom_call.1} parent=1 // pred_fallthru
      _
    // Predicated region
    $region30: #{tpu_custom_call.1} parent=1 // pred_check
      _
    $region31: #{tpu_custom_call.1} parent=1 // pred_check_branch
      %1529 = sbr.rel (0) target = $region33
    $region32: #{tpu_custom_call.1} parent=1 // pred_region
      %1531 = dma.done [#allocation6], 128
    $region33: #{tpu_custom_call.1} parent=1 // pred_fallthru
      _
    %1532 = vsyncpa [#allocation5], 1
    %1533 = vsyncpa [#allocation8], 1
    %1534 = vsyncpa [#allocation6], 1

</llo_original>
